<compile_context>
chip_gen: v5e
topology: v5e:2x2
jax: 0.10.0
libtpu: 0.0.40
codegen_flags: <defaults>
</compile_context>

<pallas_src>
import functools
import math

import jax
import jax.numpy as jnp
from jax.experimental import pallas as pl
from jax.experimental.pallas import tpu as pltpu


# ----------------------------------------------------------------------------
# Fused attention-gate Pallas kernel
# ----------------------------------------------------------------------------
def _attn_gate_kernel(x_ref, g_ref, w1x_ref, w1g_ref, b1_ref, w2_ref, b2_ref,
                      o_ref):
    """out = x * sigmoid(relu(x@W1x + g@W1g + b1) @ W2 + b2)  (per row tile)."""
    x_f32 = x_ref[...]                                   # residual kept in fp32
    x_bf = x_f32.astype(jnp.bfloat16)
    g_bf = g_ref[...].astype(jnp.bfloat16)

    # First 1x1 conv, split along K (equivalent to concat([x, g]) @ W_xg).
    h = jnp.dot(x_bf, w1x_ref[...], preferred_element_type=jnp.float32)
    h = h + jnp.dot(g_bf, w1g_ref[...], preferred_element_type=jnp.float32)
    h = jnp.maximum(h + b1_ref[...], 0.0)                # bias + ReLU (fp32)

    # Second 1x1 conv + sigmoid.
    a = jnp.dot(h.astype(jnp.bfloat16), w2_ref[...],
                preferred_element_type=jnp.float32)
    attn = jax.nn.sigmoid(a + b2_ref[...])

    o_ref[...] = (x_f32 * attn).astype(o_ref.dtype)


_CPARAMS = pltpu.CompilerParams(
    dimension_semantics=("parallel",),
    vmem_limit_bytes=48 * 1024 * 1024,   # fits v7x's 64 MiB VMEM with headroom
)


def _pick_tile_m(M):
    """Row tile: multiple of 16 (bf16 pack) and >=2 grid steps when possible."""
    for tm in (512, 256, 128, 64, 32, 16):
        if M % tm == 0 and M // tm >= 2:
            return tm
    for tm in (512, 256, 128, 64, 32, 16, 8):
        if M % tm == 0:
            return tm
    return M  # full-extent block is always legal


def attn_gate_pallas(x2d, g2d, w1x, w1g, b1, w2, b2):
    """x2d: (M,Cx) f32, g2d: (M,Cg) f32; weights are (K,Cout) matrices."""
    M, Cx = x2d.shape
    Cg = g2d.shape[1]
    Cout = w2.shape[1]
    assert Cout == Cx, "residual multiply requires out_ch == in_ch_x"

    tm = _pick_tile_m(M)
    grid = (M // tm,)

    # Pre-cast weights to bf16 once (halves weight DMA); biases stay fp32.
    w1x_bf = w1x.astype(jnp.bfloat16)
    w1g_bf = w1g.astype(jnp.bfloat16)
    w2_bf = w2.astype(jnp.bfloat16)
    b1_2d = b1.reshape(1, Cout).astype(jnp.float32)
    b2_2d = b2.reshape(1, Cout).astype(jnp.float32)

    return pl.pallas_call(
        _attn_gate_kernel,
        out_shape=jax.ShapeDtypeStruct((M, Cx), jnp.float32),
        grid=grid,
        in_specs=[
            pl.BlockSpec((tm, Cx), lambda i: (i, 0)),      # x tile
            pl.BlockSpec((tm, Cg), lambda i: (i, 0)),      # g tile
            pl.BlockSpec((Cx, Cout), lambda i: (0, 0)),    # W1x (resident)
            pl.BlockSpec((Cg, Cout), lambda i: (0, 0)),    # W1g (resident)
            pl.BlockSpec((1, Cout), lambda i: (0, 0)),     # b1
            pl.BlockSpec((Cout, Cout), lambda i: (0, 0)),  # W2 (resident)
            pl.BlockSpec((1, Cout), lambda i: (0, 0)),     # b2
        ],
        out_specs=pl.BlockSpec((tm, Cx), lambda i: (i, 0)),
        compiler_params=_CPARAMS,
    )(x2d, g2d, w1x_bf, w1g_bf, b1_2d, w2_bf, b2_2d)


# ----------------------------------------------------------------------------
# Module-level wrapper (NCHW interface, matches the PyTorch AttentionGate)
# ----------------------------------------------------------------------------
def attention_gate(x_nchw, g_nchw, params, concat=True):
    N, Cx, H, W = x_nchw.shape
    Cg = g_nchw.shape[1]
    M = N * H * W

    x2d = jnp.transpose(x_nchw, (0, 2, 3, 1)).reshape(M, Cx)
    g2d = jnp.transpose(g_nchw, (0, 2, 3, 1)).reshape(M, Cg)

    if concat:
        # cat([x, g]) @ W_xg  ==  x @ W_xg[:Cx] + g @ W_xg[Cx:]
        w1x = params["w_xg"][:Cx]
        w1g = params["w_xg"][Cx:]
    else:
        w1x = params["w_x"]
        w1g = params["w_g"]

    out2d = attn_gate_pallas(x2d, g2d, w1x, w1g,
                             params["b1"], params["w2"], params["b2"])
    return jnp.transpose(out2d.reshape(N, H, W, Cx), (0, 3, 1, 2))


def attention_gate_ref(x_nchw, g_nchw, params, concat=True):
    """Pure-JAX fp32 reference mirroring the PyTorch forward exactly."""
    x = jnp.transpose(x_nchw, (0, 2, 3, 1))
    g = jnp.transpose(g_nchw, (0, 2, 3, 1))
    if concat:
        xg = jnp.concatenate([x, g], axis=-1)
        h = xg @ params["w_xg"] + params["b1"]
    else:
        h = x @ params["w_x"] + g @ params["w_g"] + params["b1"]
    h = jnp.maximum(h, 0.0)
    attn = jax.nn.sigmoid(h @ params["w2"] + params["b2"])
    return jnp.transpose(x * attn, (0, 3, 1, 2))


# ----------------------------------------------------------------------------
# Deterministic synthetic parameters
# ----------------------------------------------------------------------------
def init_params(key, cx, cg, cout, concat=True):
    ks = jax.random.split(key, 5)

    def w(k, cin, co):
        return jax.random.normal(k, (cin, co), jnp.float32) / math.sqrt(cin)

    p = {}
    if concat:
        p["w_xg"] = w(ks[0], cx + cg, cout)
    else:
        p["w_x"] = w(ks[0], cx, cout)            # bias=False in PyTorch
        p["w_g"] = w(ks[1], cg, cout)
    p["b1"] = 0.05 * jax.random.normal(ks[2], (cout,), jnp.float32)
    p["w2"] = w(ks[3], cout, cout)
    p["b2"] = 0.05 * jax.random.normal(ks[4], (cout,), jnp.float32)
    return p


if __name__ == "__main__":
    key = jax.random.PRNGKey(0)
    kx, kg, kp1, kp2 = jax.random.split(key, 4)

    # Small shapes consistent with how the gate is used in the U-Net:
    # x: skip features, g: gating features (more channels), out_ch == in_ch_x.
    N, H, W = 2, 16, 16
    Cx, Cg, Cout = 128, 256, 128

    x = jax.random.normal(kx, (N, Cx, H, W), jnp.float32)
    g = jax.random.normal(kg, (N, Cg, H, W), jnp.float32)

    for concat, kp in ((True, kp1), (False, kp2)):
        params = init_params(kp, Cx, Cg, Cout, concat=concat)
        fwd = jax.jit(functools.partial(attention_gate, concat=concat))
        out = jax.block_until_ready(fwd(x, g, params))
        assert out.shape == (N, Cx, H, W), out.shape
        assert bool(jnp.all(jnp.isfinite(out)))
        ref = attention_gate_ref(x, g, params, concat=concat)
        max_err = float(jnp.max(jnp.abs(out - ref)))
        assert max_err < 2e-2, f"concat={concat}: max abs err {max_err}"

    print("KERNEL_OK")
</pallas_src>

<mosaic_0001>
module attributes {stable_mosaic.version = 11 : i64} {
  func.func @_attn_gate_kernel(%arg0: i32, %arg1: memref<256x128xf32, #tpu.memory_space<vmem>>, %arg2: memref<256x256xf32, #tpu.memory_space<vmem>>, %arg3: memref<128x128xbf16, #tpu.memory_space<vmem>>, %arg4: memref<256x128xbf16, #tpu.memory_space<vmem>>, %arg5: memref<1x128xf32, #tpu.memory_space<vmem>>, %arg6: memref<128x128xbf16, #tpu.memory_space<vmem>>, %arg7: memref<1x128xf32, #tpu.memory_space<vmem>>, %arg8: memref<256x128xf32, #tpu.memory_space<vmem>>) attributes {dimension_semantics = [#tpu.dimension_semantics<parallel>], iteration_bounds = array<i64: 2>, scalar_prefetch = 0 : i64, scratch_operands = 0 : i64, tpu.core_type = #tpu.core_type<tc>, window_params = [{transform_indices = @transform_0, window_bounds = array<i64: 256, 128>}, {transform_indices = @transform_1, window_bounds = array<i64: 256, 256>}, {pipeline_mode = #tpu.pipeline_mode<synchronous>, transform_indices = @transform_2, window_bounds = array<i64: 128, 128>}, {pipeline_mode = #tpu.pipeline_mode<synchronous>, transform_indices = @transform_3, window_bounds = array<i64: 256, 128>}, {pipeline_mode = #tpu.pipeline_mode<synchronous>, transform_indices = @transform_4, window_bounds = array<i64: 1, 128>}, {pipeline_mode = #tpu.pipeline_mode<synchronous>, transform_indices = @transform_5, window_bounds = array<i64: 128, 128>}, {pipeline_mode = #tpu.pipeline_mode<synchronous>, transform_indices = @transform_6, window_bounds = array<i64: 1, 128>}, {transform_indices = @transform_7, window_bounds = array<i64: 256, 128>}]} {
    %c0 = arith.constant 0 : index
    %c0_0 = arith.constant 0 : index
    %0 = vector.load %arg1[%c0, %c0_0] : memref<256x128xf32, #tpu.memory_space<vmem>>, vector<256x128xf32>
    %1 = arith.truncf %0 : vector<256x128xf32> to vector<256x128xbf16>
    %c0_1 = arith.constant 0 : index
    %c0_2 = arith.constant 0 : index
    %2 = vector.load %arg2[%c0_1, %c0_2] : memref<256x256xf32, #tpu.memory_space<vmem>>, vector<256x256xf32>
    %3 = arith.truncf %2 : vector<256x256xf32> to vector<256x256xbf16>
    %c0_3 = arith.constant 0 : index
    %c0_4 = arith.constant 0 : index
    %4 = vector.load %arg3[%c0_3, %c0_4] : memref<128x128xbf16, #tpu.memory_space<vmem>>, vector<128x128xbf16>
    %cst = arith.constant dense<0.000000e+00> : vector<256x128xf32>
    %5 = tpu.matmul %1, %4, %cst {dimension_numbers = #tpu.dot_dimension_numbers<[1], [0], [0], [1], [0, 0, 1, 1], [], []>} : vector<256x128xbf16>, vector<128x128xbf16>, vector<256x128xf32> -> vector<256x128xf32>
    %c0_5 = arith.constant 0 : index
    %c0_6 = arith.constant 0 : index
    %6 = vector.load %arg4[%c0_5, %c0_6] : memref<256x128xbf16, #tpu.memory_space<vmem>>, vector<256x128xbf16>
    %cst_7 = arith.constant dense<0.000000e+00> : vector<256x128xf32>
    %7 = tpu.matmul %3, %6, %cst_7 {dimension_numbers = #tpu.dot_dimension_numbers<[1], [0], [0], [1], [0, 0, 1, 1], [], []>} : vector<256x256xbf16>, vector<256x128xbf16>, vector<256x128xf32> -> vector<256x128xf32>
    %8 = arith.addf %5, %7 : vector<256x128xf32>
    %c0_8 = arith.constant 0 : index
    %c0_9 = arith.constant 0 : index
    %9 = vector.load %arg5[%c0_8, %c0_9] : memref<1x128xf32, #tpu.memory_space<vmem>>, vector<1x128xf32>
    %10 = vector.broadcast %9 : vector<1x128xf32> to vector<256x128xf32>
    %11 = arith.addf %8, %10 : vector<256x128xf32>
    %cst_10 = arith.constant 0.000000e+00 : f32
    %12 = vector.broadcast %cst_10 : f32 to vector<256x128xf32>
    %13 = arith.maximumf %11, %12 : vector<256x128xf32>
    %14 = arith.truncf %13 : vector<256x128xf32> to vector<256x128xbf16>
    %c0_11 = arith.constant 0 : index
    %c0_12 = arith.constant 0 : index
    %15 = vector.load %arg6[%c0_11, %c0_12] : memref<128x128xbf16, #tpu.memory_space<vmem>>, vector<128x128xbf16>
    %cst_13 = arith.constant dense<0.000000e+00> : vector<256x128xf32>
    %16 = tpu.matmul %14, %15, %cst_13 {dimension_numbers = #tpu.dot_dimension_numbers<[1], [0], [0], [1], [0, 0, 1, 1], [], []>} : vector<256x128xbf16>, vector<128x128xbf16>, vector<256x128xf32> -> vector<256x128xf32>
    %c0_14 = arith.constant 0 : index
    %c0_15 = arith.constant 0 : index
    %17 = vector.load %arg7[%c0_14, %c0_15] : memref<1x128xf32, #tpu.memory_space<vmem>>, vector<1x128xf32>
    %18 = vector.broadcast %17 : vector<1x128xf32> to vector<256x128xf32>
    %19 = arith.addf %16, %18 : vector<256x128xf32>
    %20 = arith.negf %19 : vector<256x128xf32>
    %21 = math.exp %20 : vector<256x128xf32>
    %cst_16 = arith.constant 1.000000e+00 : f32
    %22 = vector.broadcast %cst_16 : f32 to vector<256x128xf32>
    %23 = arith.addf %22, %21 : vector<256x128xf32>
    %24 = arith.divf %22, %23 : vector<256x128xf32>
    %25 = arith.mulf %0, %24 : vector<256x128xf32>
    %c0_17 = arith.constant 0 : index
    %c0_18 = arith.constant 0 : index
    %26 = vector.load %arg8[%c0_17, %c0_18] : memref<256x128xf32, #tpu.memory_space<vmem>>, vector<256x128xf32>
    tpu.vector_store %arg8[%c0_17, %c0_18], %25 {strides = array<i32>} : memref<256x128xf32, #tpu.memory_space<vmem>>, vector<256x128xf32>,
    return
  }
  func.func @transform_0(%arg0: i32) -> (i32, i32) {
    %c0_i32 = arith.constant 0 : i32
    %c0_i32_0 = arith.constant 0 : i32
    return %arg0, %c0_i32 : i32, i32
  }
  func.func @transform_1(%arg0: i32) -> (i32, i32) {
    %c0_i32 = arith.constant 0 : i32
    %c0_i32_0 = arith.constant 0 : i32
    return %arg0, %c0_i32 : i32, i32
  }
  func.func @transform_2(%arg0: i32) -> (i32, i32) {
    %c0_i32 = arith.constant 0 : i32
    %c0_i32_0 = arith.constant 0 : i32
    %c0_i32_1 = arith.constant 0 : i32
    return %c0_i32, %c0_i32_0 : i32, i32
  }
  func.func @transform_3(%arg0: i32) -> (i32, i32) {
    %c0_i32 = arith.constant 0 : i32
    %c0_i32_0 = arith.constant 0 : i32
    %c0_i32_1 = arith.constant 0 : i32
    return %c0_i32, %c0_i32_0 : i32, i32
  }
  func.func @transform_4(%arg0: i32) -> (i32, i32) {
    %c0_i32 = arith.constant 0 : i32
    %c0_i32_0 = arith.constant 0 : i32
    %c0_i32_1 = arith.constant 0 : i32
    return %c0_i32, %c0_i32_0 : i32, i32
  }
  func.func @transform_5(%arg0: i32) -> (i32, i32) {
    %c0_i32 = arith.constant 0 : i32
    %c0_i32_0 = arith.constant 0 : i32
    %c0_i32_1 = arith.constant 0 : i32
    return %c0_i32, %c0_i32_0 : i32, i32
  }
  func.func @transform_6(%arg0: i32) -> (i32, i32) {
    %c0_i32 = arith.constant 0 : i32
    %c0_i32_0 = arith.constant 0 : i32
    %c0_i32_1 = arith.constant 0 : i32
    return %c0_i32, %c0_i32_0 : i32, i32
  }
  func.func @transform_7(%arg0: i32) -> (i32, i32) {
    %c0_i32 = arith.constant 0 : i32
    %c0_i32_0 = arith.constant 0 : i32
    return %arg0, %c0_i32 : i32, i32
  }
}

</mosaic_0001>

<llo_original>
// kernel: attention_gate.1
$region0: #{attention_gate.1}
  #allocation0 [shape = 'u32[]', space=smem, size = 0x4, offset = 0x4, fixed_abs, tag = 'smem constant byte address 0x4 - core index']
  #allocation1 [shape = 'u32[72,128]{1,0:T(1,128)}', space=vmem, size = 0x9000, scoped, tag = 'internal scratch']
  %s0 = inlined_call_operand.hbm [shape: f32[512,128], index: 0, kind: input, shape index: {}]
  %s1 = inlined_call_operand.vmem [shape: f32[512,256], index: 1, kind: input, shape index: {}]
  %s2 = inlined_call_operand.vmem [shape: bf16[128,128], index: 2, kind: input, shape index: {}]
  %s3 = inlined_call_operand.vmem [shape: bf16[256,128], index: 3, kind: input, shape index: {}]
  %s4 = inlined_call_operand.vmem [shape: f32[1,128], index: 4, kind: input, shape index: {}]
  %s5 = inlined_call_operand.vmem [shape: bf16[128,128], index: 5, kind: input, shape index: {}]
  %s6 = inlined_call_operand.vmem [shape: f32[1,128], index: 6, kind: input, shape index: {}]
  %s7 = inlined_call_operand.hbm [shape: f32[512,128], index: 7, kind: output, shape index: {}]
  %s8 = sld [smem:[#allocation0]]
  $region65: #{attention_gate.1} parent=0
    _
  %s10 = ssub.s32 1, %s8
  %s11 = scalar_select 0, %s10, %s8
  $region1: #{attention_gate.1} parent=0
    #allocation2 [shape = 'u8[262144]{0}', space=vmem, size = 0x40000, scoped, tag = 'input window, operand 0']
    #allocation3 [shape = 's32[2]{0}', space=sflag, size = 0x8, scoped, tag = 'scoped memory for attention_gate.1']
    #allocation4 [shape = 's32[2]{0}', space=sflag, size = 0x8, scoped, tag = 'scoped memory for attention_gate.1']
    #allocation5 [shape = 'u8[262144]{0}', space=vmem, size = 0x40000, scoped, tag = 'output window, operand 0']
    %12 = vsyncpa [#allocation3], 0
    %s13 = scalar_lea.sflag [#allocation3], 1
    %14 = vsyncpa %s13, 0
    %15 = vsyncpa [#allocation4], 0
    %s16 = scalar_lea.sflag [#allocation4], 1
    %17 = vsyncpa %s16, 0
    loop: start=0, step=1, limit=4
    $region2: #{attention_gate.1} parent=1 // loop_pre_header
      _
    $region3: #{attention_gate.1} parent=1 // loop_header
      %s19 = sphi 0, %s23
      %p20 = scmp.ge.s32.totalorder %s19, 4
      %s29 = sphi 0, %s31
      %s32 = sphi 0, %s29
      %s33 = sphi 0, %s32
      %s49 = sphi 0, %s33
      %s55 = sphi 0, %s57
      %s58 = sphi 0, %s55
      %s59 = sphi 0, %s58
      %s75 = sphi 0, %s59
      %s79 = sphi 0, %s79
      %s81 = sphi 0, %s79
      %s82 = sphi 0, %s81
      %s96 = sphi 0, %s82
      %s100 = sphi 0, %s100
      %s102 = sphi 0, %s100
      %s103 = sphi 0, %s102
      %s117 = sphi 0, %s103
      %s121 = sphi 0, %s121
      %s123 = sphi 0, %s121
      %s124 = sphi 0, %s123
      %s138 = sphi 0, %s124
      %s142 = sphi 0, %s142
      %s144 = sphi 0, %s142
      %s145 = sphi 0, %s144
      %s159 = sphi 0, %s145
      %s163 = sphi 0, %s163
      %s165 = sphi 0, %s163
      %s166 = sphi 0, %s165
      %s180 = sphi 0, %s166
      %s186 = sphi 0, %s188
      %s189 = sphi 0, %s186
      %s190 = sphi 0, %s189
      %s206 = sphi 0, %s190
    $region4: #{attention_gate.1} parent=1 // loop_header_branch
      %22 = sbr.rel (%p20) target = $region8
    $region5: #{attention_gate.1} parent=1 // loop_body
      %s24 = ssub.s32 %s19, 1
      %s25 = ssub.s32 %s19, 2
      %s26 = sadd.s32 %s19, 1
      %s27 = ssub.s32 %s19, %s26
      %p28 = scmp.eq.s32.totalorder %s27, 0
      %s30 = sadd.s32 %s29, 1
      %s31 = scalar_select %p28, %s29, %s30
      %p34 = pneg %p28
      %p35 = scmp.eq.s32.totalorder %s19, 1
      %p36 = por %p34, %p35
      %p37 = scmp.ne.s32.totalorder %s29, %s32
      %p38 = scmp.eq.s32.totalorder %s19, 0
      %p39 = por %p37, %p38
      %p40 = scmp.ne.s32.totalorder %s29, %s32
      %p41 = scmp.eq.s32.totalorder %s24, 1
      %p42 = por %p40, %p41
      %p43 = scmp.ne.s32.totalorder %s32, %s33
      %p44 = scmp.eq.s32.totalorder %s24, 0
      %p45 = por %p43, %p44
      %p46 = scmp.ne.s32.totalorder %s32, %s33
      %p47 = scmp.eq.s32.totalorder %s25, 1
      %p48 = por %p46, %p47
      %p50 = scmp.ne.s32.totalorder %s33, %s49
      %p51 = scmp.eq.s32.totalorder %s25, 0
      %p52 = por %p50, %p51
      %s53 = ssub.s32 %s19, %s26
      %p54 = scmp.eq.s32.totalorder %s53, 0
      %s56 = sadd.s32 %s55, 1
      %s57 = scalar_select %p54, %s55, %s56
      %p60 = pneg %p54
      %p61 = scmp.eq.s32.totalorder %s19, 1
      %p62 = por %p60, %p61
      %p63 = scmp.ne.s32.totalorder %s55, %s58
      %p64 = scmp.eq.s32.totalorder %s19, 0
      %p65 = por %p63, %p64
      %p66 = scmp.ne.s32.totalorder %s55, %s58
      %p67 = scmp.eq.s32.totalorder %s24, 1
      %p68 = por %p66, %p67
      %p69 = scmp.ne.s32.totalorder %s58, %s59
      %p70 = scmp.eq.s32.totalorder %s24, 0
      %p71 = por %p69, %p70
      %p72 = scmp.ne.s32.totalorder %s58, %s59
      %p73 = scmp.eq.s32.totalorder %s25, 1
      %p74 = por %p72, %p73
      %p76 = scmp.ne.s32.totalorder %s59, %s75
      %p77 = scmp.eq.s32.totalorder %s25, 0
      %p78 = por %p76, %p77
      %s80 = sadd.s32 %s79, 1
      %p83 = scmp.eq.s32.totalorder %s19, 1
      %p84 = scmp.ne.s32.totalorder %s79, %s81
      %p85 = scmp.eq.s32.totalorder %s19, 0
      %p86 = por %p84, %p85
      %p87 = scmp.ne.s32.totalorder %s79, %s81
      %p88 = scmp.eq.s32.totalorder %s24, 1
      %p89 = por %p87, %p88
      %p90 = scmp.ne.s32.totalorder %s81, %s82
      %p91 = scmp.eq.s32.totalorder %s24, 0
      %p92 = por %p90, %p91
      %p93 = scmp.ne.s32.totalorder %s81, %s82
      %p94 = scmp.eq.s32.totalorder %s25, 1
      %p95 = por %p93, %p94
      %p97 = scmp.ne.s32.totalorder %s82, %s96
      %p98 = scmp.eq.s32.totalorder %s25, 0
      %p99 = por %p97, %p98
      %s101 = sadd.s32 %s100, 1
      %p104 = scmp.eq.s32.totalorder %s19, 1
      %p105 = scmp.ne.s32.totalorder %s100, %s102
      %p106 = scmp.eq.s32.totalorder %s19, 0
      %p107 = por %p105, %p106
      %p108 = scmp.ne.s32.totalorder %s100, %s102
      %p109 = scmp.eq.s32.totalorder %s24, 1
      %p110 = por %p108, %p109
      %p111 = scmp.ne.s32.totalorder %s102, %s103
      %p112 = scmp.eq.s32.totalorder %s24, 0
      %p113 = por %p111, %p112
      %p114 = scmp.ne.s32.totalorder %s102, %s103
      %p115 = scmp.eq.s32.totalorder %s25, 1
      %p116 = por %p114, %p115
      %p118 = scmp.ne.s32.totalorder %s103, %s117
      %p119 = scmp.eq.s32.totalorder %s25, 0
      %p120 = por %p118, %p119
      %s122 = sadd.s32 %s121, 1
      %p125 = scmp.eq.s32.totalorder %s19, 1
      %p126 = scmp.ne.s32.totalorder %s121, %s123
      %p127 = scmp.eq.s32.totalorder %s19, 0
      %p128 = por %p126, %p127
      %p129 = scmp.ne.s32.totalorder %s121, %s123
      %p130 = scmp.eq.s32.totalorder %s24, 1
      %p131 = por %p129, %p130
      %p132 = scmp.ne.s32.totalorder %s123, %s124
      %p133 = scmp.eq.s32.totalorder %s24, 0
      %p134 = por %p132, %p133
      %p135 = scmp.ne.s32.totalorder %s123, %s124
      %p136 = scmp.eq.s32.totalorder %s25, 1
      %p137 = por %p135, %p136
      %p139 = scmp.ne.s32.totalorder %s124, %s138
      %p140 = scmp.eq.s32.totalorder %s25, 0
      %p141 = por %p139, %p140
      %s143 = sadd.s32 %s142, 1
      %p146 = scmp.eq.s32.totalorder %s19, 1
      %p147 = scmp.ne.s32.totalorder %s142, %s144
      %p148 = scmp.eq.s32.totalorder %s19, 0
      %p149 = por %p147, %p148
      %p150 = scmp.ne.s32.totalorder %s142, %s144
      %p151 = scmp.eq.s32.totalorder %s24, 1
      %p152 = por %p150, %p151
      %p153 = scmp.ne.s32.totalorder %s144, %s145
      %p154 = scmp.eq.s32.totalorder %s24, 0
      %p155 = por %p153, %p154
      %p156 = scmp.ne.s32.totalorder %s144, %s145
      %p157 = scmp.eq.s32.totalorder %s25, 1
      %p158 = por %p156, %p157
      %p160 = scmp.ne.s32.totalorder %s145, %s159
      %p161 = scmp.eq.s32.totalorder %s25, 0
      %p162 = por %p160, %p161
      %s164 = sadd.s32 %s163, 1
      %p167 = scmp.eq.s32.totalorder %s19, 1
      %p168 = scmp.ne.s32.totalorder %s163, %s165
      %p169 = scmp.eq.s32.totalorder %s19, 0
      %p170 = por %p168, %p169
      %p171 = scmp.ne.s32.totalorder %s163, %s165
      %p172 = scmp.eq.s32.totalorder %s24, 1
      %p173 = por %p171, %p172
      %p174 = scmp.ne.s32.totalorder %s165, %s166
      %p175 = scmp.eq.s32.totalorder %s24, 0
      %p176 = por %p174, %p175
      %p177 = scmp.ne.s32.totalorder %s165, %s166
      %p178 = scmp.eq.s32.totalorder %s25, 1
      %p179 = por %p177, %p178
      %p181 = scmp.ne.s32.totalorder %s166, %s180
      %p182 = scmp.eq.s32.totalorder %s25, 0
      %p183 = por %p181, %p182
      %s184 = ssub.s32 %s19, %s26
      %p185 = scmp.eq.s32.totalorder %s184, 0
      %s187 = sadd.s32 %s186, 1
      %s188 = scalar_select %p185, %s186, %s187
      %p191 = pneg %p185
      %p192 = scmp.eq.s32.totalorder %s19, 1
      %p193 = por %p191, %p192
      %p194 = scmp.ne.s32.totalorder %s186, %s189
      %p195 = scmp.eq.s32.totalorder %s19, 0
      %p196 = por %p194, %p195
      %p197 = scmp.ne.s32.totalorder %s186, %s189
      %p198 = scmp.eq.s32.totalorder %s24, 1
      %p199 = por %p197, %p198
      %p200 = scmp.ne.s32.totalorder %s189, %s190
      %p201 = scmp.eq.s32.totalorder %s24, 0
      %p202 = por %p200, %p201
      %p203 = scmp.ne.s32.totalorder %s189, %s190
      %p204 = scmp.eq.s32.totalorder %s25, 1
      %p205 = por %p203, %p204
      %p207 = scmp.ne.s32.totalorder %s190, %s206
      %p208 = scmp.eq.s32.totalorder %s25, 0
      %p209 = por %p207, %p208
      %p210 = scmp.le.s32.totalorder 1, %s19
      %p211 = scmp.lt.s32.totalorder %s19, 3
      %p212 = pnand %p210, %p211
      %p213 = pneg %p212
      // Predicated region
      $region9: #{attention_gate.1} parent=5 // pred_check
        _
      $region10: #{attention_gate.1} parent=5 // pred_check_branch
        %215 = sbr.rel (%p212) target = $region12
      $region11: #{attention_gate.1} parent=5 // pred_region
        %s216 = ssub.s32 %s19, 1
        // Predicated region
        $region13: #{attention_gate.1} parent=11 // pred_check
          %p217 = pneg %p92
        $region14: #{attention_gate.1} parent=11 // pred_check_branch
          %219 = sbr.rel (%p217) target = $region16
        $region15: #{attention_gate.1} parent=11 // pred_region
          _
        $region16: #{attention_gate.1} parent=11 // pred_fallthru
          _
        // Predicated region
        $region17: #{attention_gate.1} parent=11 // pred_check
          %p220 = pneg %p113
        $region18: #{attention_gate.1} parent=11 // pred_check_branch
          %222 = sbr.rel (%p220) target = $region20
        $region19: #{attention_gate.1} parent=11 // pred_region
          _
        $region20: #{attention_gate.1} parent=11 // pred_fallthru
          _
        // Predicated region
        $region21: #{attention_gate.1} parent=11 // pred_check
          %p223 = pneg %p134
        $region22: #{attention_gate.1} parent=11 // pred_check_branch
          %225 = sbr.rel (%p223) target = $region24
        $region23: #{attention_gate.1} parent=11 // pred_region
          _
        $region24: #{attention_gate.1} parent=11 // pred_fallthru
          _
        // Predicated region
        $region25: #{attention_gate.1} parent=11 // pred_check
          %p226 = pneg %p155
        $region26: #{attention_gate.1} parent=11 // pred_check_branch
          %228 = sbr.rel (%p226) target = $region28
        $region27: #{attention_gate.1} parent=11 // pred_region
          _
        $region28: #{attention_gate.1} parent=11 // pred_fallthru
          _
        // Predicated region
        $region29: #{attention_gate.1} parent=11 // pred_check
          %p229 = pneg %p176
        $region30: #{attention_gate.1} parent=11 // pred_check_branch
          %231 = sbr.rel (%p229) target = $region32
        $region31: #{attention_gate.1} parent=11 // pred_region
          _
        $region32: #{attention_gate.1} parent=11 // pred_fallthru
          _
      $region12: #{attention_gate.1} parent=5 // pred_fallthru
        _
      %p232 = scmp.lt.s32.totalorder %s19, 2
      // Predicated region
      $region33: #{attention_gate.1} parent=5 // pred_check
        %p233 = pneg %p232
      $region34: #{attention_gate.1} parent=5 // pred_check_branch
        %235 = sbr.rel (%p233) target = $region36
      $region35: #{attention_gate.1} parent=5 // pred_region
        // Predicated region
        $region37: #{attention_gate.1} parent=35 // pred_check
          %p236 = pneg %p39
        $region38: #{attention_gate.1} parent=35 // pred_check_branch
          %238 = sbr.rel (%p236) target = $region40
        $region39: #{attention_gate.1} parent=35 // pred_region
          %s239 = sand.u32 %s29, 1
          %s240 = scalar_lea.sflag [#allocation3], %s239
          %s241 = sand.u32 %s29, 1
          %s242 = smul.addr %s241, 256
          %s243 = scalar_lea.vmem [#allocation2], %s242
          %s244 = smul.u32 32, %s19
          %246 = vsyncadd %s240, 0
          %s247 = smul.addr %s244, 8
          %s248 = scalar_lea.hbm %s0, %s247
          %s249 = sshll.u32 %s248, 4
          %s250 = int_to_ptr.hbm [resolvable:$true] %s249
          %s251 = sshll.u32 %s243, 4
          %s252 = int_to_ptr.vmem [resolvable:$true] %s251
          %257 = dma.hbm_to_vmem [thread:$0]  %s250, 4096, %s252, %s240, 128, 128, 8
        $region40: #{attention_gate.1} parent=35 // pred_fallthru
          _
        // Predicated region
        $region41: #{attention_gate.1} parent=35 // pred_check
          %p258 = pneg %p65
        $region42: #{attention_gate.1} parent=35 // pred_check_branch
          %260 = sbr.rel (%p258) target = $region44
        $region43: #{attention_gate.1} parent=35 // pred_region
          %s261 = smul.u32 32, %s19
          %p262 = scmp.lt.s32.totalorder %s261, 63
          %s263 = scalar_select %p262, %s261, 63
          %s264 = smul.addr %s263, 2
          %s265 = smul.addr %s264, 8
          %s266 = scalar_lea.vmem %s1, %s265
          %s267 = smul.u32 32, %s19
        $region44: #{attention_gate.1} parent=35 // pred_fallthru
          _
      $region36: #{attention_gate.1} parent=5 // pred_fallthru
        _
      %p268 = scmp.le.s32.totalorder 1, %s19
      %p269 = scmp.lt.s32.totalorder %s19, 3
      %p270 = pnand %p268, %p269
      %p271 = pneg %p270
      // Predicated region
      $region45: #{attention_gate.1} parent=5 // pred_check
        _
      $region46: #{attention_gate.1} parent=5 // pred_check_branch
        %273 = sbr.rel (%p270) target = $region48
      $region47: #{attention_gate.1} parent=5 // pred_region
        %s274 = ssub.s32 %s19, 1
        %s275 = sand.u32 %s32, 1
        %s276 = scalar_lea.sflag [#allocation3], %s275
        %s277 = sand.u32 %s32, 1
        %s278 = smul.addr %s277, 256
        %s279 = scalar_lea.vmem [#allocation2], %s278
        // Predicated region
        $region49: #{attention_gate.1} parent=47 // pred_check
          %p280 = pneg %p45
        $region50: #{attention_gate.1} parent=47 // pred_check_branch
          %282 = sbr.rel (%p280) target = $region52
        $region51: #{attention_gate.1} parent=47 // pred_region
          %284 = dma.done %s276, 4096
        $region52: #{attention_gate.1} parent=47 // pred_fallthru
          _
        %s285 = sand.u32 %s32, 1
        %s286 = scalar_lea.sflag [#allocation3], %s285
        %s287 = sand.u32 %s32, 1
        %s288 = smul.addr %s287, 256
        %s289 = scalar_lea.vmem [#allocation2], %s288
        %p290 = pneg %p45
        %p291 = pneg %p42
        %s292 = smul.u32 32, %s24
        %p293 = scmp.lt.s32.totalorder %s292, 63
        %s294 = scalar_select %p293, %s292, 63
        %s295 = smul.addr %s294, 2
        %s296 = smul.addr %s295, 8
        %s297 = scalar_lea.vmem %s1, %s296
        %p298 = pneg %p71
        %p299 = pneg %p68
        %p300 = pneg %p92
        %p301 = pneg %p89
        %p302 = pneg %p113
        %p303 = pneg %p110
        %p304 = pneg %p134
        %p305 = pneg %p131
        %p306 = pneg %p155
        %p307 = pneg %p152
        %p308 = pneg %p176
        %p309 = pneg %p173
        %p310 = pneg %p202
        %p311 = pneg %p199
        %s312 = sand.u32 %s189, 1
        %s313 = scalar_lea.sflag [#allocation4], %s312
        %s314 = sand.u32 %s189, 1
        %s315 = smul.addr %s314, 256
        %s316 = scalar_lea.vmem [#allocation5], %s315
        %s317 = smul.u32 32, %s24
        %s318 = smul.u32 32, %s24
        %p319 = scmp.lt.s32.totalorder %s318, 63
        %s320 = scalar_select %p319, %s318, 63
        %s321 = smul.addr %s320, 2
        %s322 = smul.addr %s321, 8
        %s323 = scalar_lea.vmem %s1, %s322
        %s324 = smul.u32 32, %s24
        %s325 = smul.u32 32, %s24
        %v326 = vld [vmem:[%s279] sm:$0xff]
        %v327 = vld [vmem:[%s279 + $0x8] sm:$0xff]
        %v328 = vld [vmem:[%s279 + $0x10] sm:$0xff]
        %v329 = vld [vmem:[%s279 + $0x18] sm:$0xff]
        %v330 = vld [vmem:[%s279 + $0x20] sm:$0xff]
        %v331 = vld [vmem:[%s279 + $0x28] sm:$0xff]
        %v332 = vld [vmem:[%s279 + $0x30] sm:$0xff]
        %v333 = vld [vmem:[%s279 + $0x38] sm:$0xff]
        %v334 = vld [vmem:[%s279 + $0x40] sm:$0xff]
        %v335 = vld [vmem:[%s279 + $0x48] sm:$0xff]
        %v336 = vld [vmem:[%s279 + $0x50] sm:$0xff]
        %v337 = vld [vmem:[%s279 + $0x58] sm:$0xff]
        %v338 = vld [vmem:[%s279 + $0x60] sm:$0xff]
        %v339 = vld [vmem:[%s279 + $0x68] sm:$0xff]
        %v340 = vld [vmem:[%s279 + $0x70] sm:$0xff]
        %v341 = vld [vmem:[%s279 + $0x78] sm:$0xff]
        %v342 = vld [vmem:[%s279 + $0x80] sm:$0xff]
        %v343 = vld [vmem:[%s279 + $0x88] sm:$0xff]
        %v344 = vld [vmem:[%s279 + $0x90] sm:$0xff]
        %v345 = vld [vmem:[%s279 + $0x98] sm:$0xff]
        %v346 = vld [vmem:[%s279 + $0xa0] sm:$0xff]
        %v347 = vld [vmem:[%s279 + $0xa8] sm:$0xff]
        %v348 = vld [vmem:[%s279 + $0xb0] sm:$0xff]
        %v349 = vld [vmem:[%s279 + $0xb8] sm:$0xff]
        %v350 = vld [vmem:[%s279 + $0xc0] sm:$0xff]
        %v351 = vld [vmem:[%s279 + $0xc8] sm:$0xff]
        %v352 = vld [vmem:[%s279 + $0xd0] sm:$0xff]
        %v353 = vld [vmem:[%s279 + $0xd8] sm:$0xff]
        %v354 = vld [vmem:[%s279 + $0xe0] sm:$0xff]
        %v355 = vld [vmem:[%s279 + $0xe8] sm:$0xff]
        %v356 = vld [vmem:[%s279 + $0xf0] sm:$0xff]
        %v357 = vld [vmem:[%s279 + $0xf8] sm:$0xff]
        %v358 = vpack.c.bf16 %v327, %v326
        %v359 = vpack.c.bf16 %v329, %v328
        %v360 = vpack.c.bf16 %v331, %v330
        %v361 = vpack.c.bf16 %v333, %v332
        %v362 = vpack.c.bf16 %v335, %v334
        %v363 = vpack.c.bf16 %v337, %v336
        %v364 = vpack.c.bf16 %v339, %v338
        %v365 = vpack.c.bf16 %v341, %v340
        %v366 = vpack.c.bf16 %v343, %v342
        %v367 = vpack.c.bf16 %v345, %v344
        %v368 = vpack.c.bf16 %v347, %v346
        %v369 = vpack.c.bf16 %v349, %v348
        %v370 = vpack.c.bf16 %v351, %v350
        %v371 = vpack.c.bf16 %v353, %v352
        %v372 = vpack.c.bf16 %v355, %v354
        %v373 = vpack.c.bf16 %v357, %v356
        %v374 = vld [vmem:[%s323] sm:$0xff]
        %v375 = vld [vmem:[%s323 + $0x8] sm:$0xff]
        %v376 = vld [vmem:[%s323 + $0x10] sm:$0xff]
        %v377 = vld [vmem:[%s323 + $0x18] sm:$0xff]
        %v378 = vld [vmem:[%s323 + $0x20] sm:$0xff]
        %v379 = vld [vmem:[%s323 + $0x28] sm:$0xff]
        %v380 = vld [vmem:[%s323 + $0x30] sm:$0xff]
        %v381 = vld [vmem:[%s323 + $0x38] sm:$0xff]
        %v382 = vld [vmem:[%s323 + $0x40] sm:$0xff]
        %v383 = vld [vmem:[%s323 + $0x48] sm:$0xff]
        %v384 = vld [vmem:[%s323 + $0x50] sm:$0xff]
        %v385 = vld [vmem:[%s323 + $0x58] sm:$0xff]
        %v386 = vld [vmem:[%s323 + $0x60] sm:$0xff]
        %v387 = vld [vmem:[%s323 + $0x68] sm:$0xff]
        %v388 = vld [vmem:[%s323 + $0x70] sm:$0xff]
        %v389 = vld [vmem:[%s323 + $0x78] sm:$0xff]
        %v390 = vld [vmem:[%s323 + $0x80] sm:$0xff]
        %v391 = vld [vmem:[%s323 + $0x88] sm:$0xff]
        %v392 = vld [vmem:[%s323 + $0x90] sm:$0xff]
        %v393 = vld [vmem:[%s323 + $0x98] sm:$0xff]
        %v394 = vld [vmem:[%s323 + $0xa0] sm:$0xff]
        %v395 = vld [vmem:[%s323 + $0xa8] sm:$0xff]
        %v396 = vld [vmem:[%s323 + $0xb0] sm:$0xff]
        %v397 = vld [vmem:[%s323 + $0xb8] sm:$0xff]
        %v398 = vld [vmem:[%s323 + $0xc0] sm:$0xff]
        %v399 = vld [vmem:[%s323 + $0xc8] sm:$0xff]
        %v400 = vld [vmem:[%s323 + $0xd0] sm:$0xff]
        %v401 = vld [vmem:[%s323 + $0xd8] sm:$0xff]
        %v402 = vld [vmem:[%s323 + $0xe0] sm:$0xff]
        %v403 = vld [vmem:[%s323 + $0xe8] sm:$0xff]
        %v404 = vld [vmem:[%s323 + $0xf0] sm:$0xff]
        %v405 = vld [vmem:[%s323 + $0xf8] sm:$0xff]
        %v406 = vld [vmem:[%s323 + $0x100] sm:$0xff]
        %v407 = vld [vmem:[%s323 + $0x108] sm:$0xff]
        %v408 = vld [vmem:[%s323 + $0x110] sm:$0xff]
        %v409 = vld [vmem:[%s323 + $0x118] sm:$0xff]
        %v410 = vld [vmem:[%s323 + $0x120] sm:$0xff]
        %v411 = vld [vmem:[%s323 + $0x128] sm:$0xff]
        %v412 = vld [vmem:[%s323 + $0x130] sm:$0xff]
        %v413 = vld [vmem:[%s323 + $0x138] sm:$0xff]
        %v414 = vld [vmem:[%s323 + $0x140] sm:$0xff]
        %v415 = vld [vmem:[%s323 + $0x148] sm:$0xff]
        %v416 = vld [vmem:[%s323 + $0x150] sm:$0xff]
        %v417 = vld [vmem:[%s323 + $0x158] sm:$0xff]
        %v418 = vld [vmem:[%s323 + $0x160] sm:$0xff]
        %v419 = vld [vmem:[%s323 + $0x168] sm:$0xff]
        %v420 = vld [vmem:[%s323 + $0x170] sm:$0xff]
        %v421 = vld [vmem:[%s323 + $0x178] sm:$0xff]
        %v422 = vld [vmem:[%s323 + $0x180] sm:$0xff]
        %v423 = vld [vmem:[%s323 + $0x188] sm:$0xff]
        %v424 = vld [vmem:[%s323 + $0x190] sm:$0xff]
        %v425 = vld [vmem:[%s323 + $0x198] sm:$0xff]
        %v426 = vld [vmem:[%s323 + $0x1a0] sm:$0xff]
        %v427 = vld [vmem:[%s323 + $0x1a8] sm:$0xff]
        %v428 = vld [vmem:[%s323 + $0x1b0] sm:$0xff]
        %v429 = vld [vmem:[%s323 + $0x1b8] sm:$0xff]
        %v430 = vld [vmem:[%s323 + $0x1c0] sm:$0xff]
        %v431 = vld [vmem:[%s323 + $0x1c8] sm:$0xff]
        %v432 = vld [vmem:[%s323 + $0x1d0] sm:$0xff]
        %v433 = vld [vmem:[%s323 + $0x1d8] sm:$0xff]
        %v434 = vld [vmem:[%s323 + $0x1e0] sm:$0xff]
        %v435 = vld [vmem:[%s323 + $0x1e8] sm:$0xff]
        %v436 = vld [vmem:[%s323 + $0x1f0] sm:$0xff]
        %v437 = vld [vmem:[%s323 + $0x1f8] sm:$0xff]
        %v438 = vpack.c.bf16 %v376, %v374
        %v439 = vpack.c.bf16 %v377, %v375
        %v440 = vpack.c.bf16 %v380, %v378
        %v441 = vpack.c.bf16 %v381, %v379
        %v442 = vpack.c.bf16 %v384, %v382
        %v443 = vpack.c.bf16 %v385, %v383
        %v444 = vpack.c.bf16 %v388, %v386
        %v445 = vpack.c.bf16 %v389, %v387
        %v446 = vpack.c.bf16 %v392, %v390
        %v447 = vpack.c.bf16 %v393, %v391
        %v448 = vpack.c.bf16 %v396, %v394
        %v449 = vpack.c.bf16 %v397, %v395
        %v450 = vpack.c.bf16 %v400, %v398
        %v451 = vpack.c.bf16 %v401, %v399
        %v452 = vpack.c.bf16 %v404, %v402
        %v453 = vpack.c.bf16 %v405, %v403
        %v454 = vpack.c.bf16 %v408, %v406
        %v455 = vpack.c.bf16 %v409, %v407
        %v456 = vpack.c.bf16 %v412, %v410
        %v457 = vpack.c.bf16 %v413, %v411
        %v458 = vpack.c.bf16 %v416, %v414
        %v459 = vpack.c.bf16 %v417, %v415
        %v460 = vpack.c.bf16 %v420, %v418
        %v461 = vpack.c.bf16 %v421, %v419
        %v462 = vpack.c.bf16 %v424, %v422
        %v463 = vpack.c.bf16 %v425, %v423
        %v464 = vpack.c.bf16 %v428, %v426
        %v465 = vpack.c.bf16 %v429, %v427
        %v466 = vpack.c.bf16 %v432, %v430
        %v467 = vpack.c.bf16 %v433, %v431
        %v468 = vpack.c.bf16 %v436, %v434
        %v469 = vpack.c.bf16 %v437, %v435
        %v470 = vld [vmem:[%s2] sm:$0xf]
        %v471 = vld [vmem:[%s2 + $0x4] sm:$0xf]
        %v472 = vld [vmem:[%s2 + $0x8] sm:$0xf]
        %v473 = vld [vmem:[%s2 + $0xc] sm:$0xf]
        %v474 = vld [vmem:[%s2 + $0x10] sm:$0xf]
        %v475 = vld [vmem:[%s2 + $0x14] sm:$0xf]
        %v476 = vld [vmem:[%s2 + $0x18] sm:$0xf]
        %v477 = vld [vmem:[%s2 + $0x1c] sm:$0xf]
        %v478 = vld [vmem:[%s2 + $0x20] sm:$0xf]
        %v479 = vld [vmem:[%s2 + $0x24] sm:$0xf]
        %v480 = vld [vmem:[%s2 + $0x28] sm:$0xf]
        %v481 = vld [vmem:[%s2 + $0x2c] sm:$0xf]
        %v482 = vld [vmem:[%s2 + $0x30] sm:$0xf]
        %v483 = vld [vmem:[%s2 + $0x34] sm:$0xf]
        %v484 = vld [vmem:[%s2 + $0x38] sm:$0xf]
        %v485 = vld [vmem:[%s2 + $0x3c] sm:$0xf]
        %v486 = vld [vmem:[%s3] sm:$0xf]
        %v487 = vld [vmem:[%s3 + $0x4] sm:$0xf]
        %v488 = vld [vmem:[%s3 + $0x8] sm:$0xf]
        %v489 = vld [vmem:[%s3 + $0xc] sm:$0xf]
        %v490 = vld [vmem:[%s3 + $0x10] sm:$0xf]
        %v491 = vld [vmem:[%s3 + $0x14] sm:$0xf]
        %v492 = vld [vmem:[%s3 + $0x18] sm:$0xf]
        %v493 = vld [vmem:[%s3 + $0x1c] sm:$0xf]
        %v494 = vld [vmem:[%s3 + $0x20] sm:$0xf]
        %v495 = vld [vmem:[%s3 + $0x24] sm:$0xf]
        %v496 = vld [vmem:[%s3 + $0x28] sm:$0xf]
        %v497 = vld [vmem:[%s3 + $0x2c] sm:$0xf]
        %v498 = vld [vmem:[%s3 + $0x30] sm:$0xf]
        %v499 = vld [vmem:[%s3 + $0x34] sm:$0xf]
        %v500 = vld [vmem:[%s3 + $0x38] sm:$0xf]
        %v501 = vld [vmem:[%s3 + $0x3c] sm:$0xf]
        %v502 = vld [vmem:[%s3 + $0x40] sm:$0xf]
        %v503 = vld [vmem:[%s3 + $0x44] sm:$0xf]
        %v504 = vld [vmem:[%s3 + $0x48] sm:$0xf]
        %v505 = vld [vmem:[%s3 + $0x4c] sm:$0xf]
        %v506 = vld [vmem:[%s3 + $0x50] sm:$0xf]
        %v507 = vld [vmem:[%s3 + $0x54] sm:$0xf]
        %v508 = vld [vmem:[%s3 + $0x58] sm:$0xf]
        %v509 = vld [vmem:[%s3 + $0x5c] sm:$0xf]
        %v510 = vld [vmem:[%s3 + $0x60] sm:$0xf]
        %v511 = vld [vmem:[%s3 + $0x64] sm:$0xf]
        %v512 = vld [vmem:[%s3 + $0x68] sm:$0xf]
        %v513 = vld [vmem:[%s3 + $0x6c] sm:$0xf]
        %v514 = vld [vmem:[%s3 + $0x70] sm:$0xf]
        %v515 = vld [vmem:[%s3 + $0x74] sm:$0xf]
        %v516 = vld [vmem:[%s3 + $0x78] sm:$0xf]
        %v517 = vld [vmem:[%s3 + $0x7c] sm:$0xf]
        %v550 = vunpack.c.l.b16 %v486
        %v551 = vunpack.c.l.b16 %v487
        %v552 = vunpack.c.l.b16 %v488
        %v553 = vunpack.c.l.b16 %v489
        %v554 = vunpack.c.l.b16 %v490
        %v555 = vunpack.c.l.b16 %v491
        %v556 = vunpack.c.l.b16 %v492
        %v557 = vunpack.c.l.b16 %v493
        %v558 = vunpack.c.l.b16 %v494
        %v559 = vunpack.c.l.b16 %v495
        %v560 = vunpack.c.l.b16 %v496
        %v561 = vunpack.c.l.b16 %v497
        %v562 = vunpack.c.l.b16 %v498
        %v563 = vunpack.c.l.b16 %v499
        %v564 = vunpack.c.l.b16 %v500
        %v565 = vunpack.c.l.b16 %v501
        %v566 = vunpack.c.l.b16 %v502
        %v567 = vunpack.c.l.b16 %v503
        %v568 = vunpack.c.l.b16 %v504
        %v569 = vunpack.c.l.b16 %v505
        %v570 = vunpack.c.l.b16 %v506
        %v571 = vunpack.c.l.b16 %v507
        %v572 = vunpack.c.l.b16 %v508
        %v573 = vunpack.c.l.b16 %v509
        %v574 = vunpack.c.l.b16 %v510
        %v575 = vunpack.c.l.b16 %v511
        %v576 = vunpack.c.l.b16 %v512
        %v577 = vunpack.c.l.b16 %v513
        %v578 = vunpack.c.l.b16 %v514
        %v579 = vunpack.c.l.b16 %v515
        %v580 = vunpack.c.l.b16 %v516
        %v581 = vunpack.c.l.b16 %v517
        %v582 = vpack.c.b16 %v551, %v550
        %v583 = vpack.c.b16 %v553, %v552
        %v584 = vpack.c.b16 %v555, %v554
        %v585 = vpack.c.b16 %v557, %v556
        %v586 = vpack.c.b16 %v559, %v558
        %v587 = vpack.c.b16 %v561, %v560
        %v588 = vpack.c.b16 %v563, %v562
        %v589 = vpack.c.b16 %v565, %v564
        %v590 = vpack.c.b16 %v567, %v566
        %v591 = vpack.c.b16 %v569, %v568
        %v592 = vpack.c.b16 %v571, %v570
        %v593 = vpack.c.b16 %v573, %v572
        %v594 = vpack.c.b16 %v575, %v574
        %v595 = vpack.c.b16 %v577, %v576
        %v596 = vpack.c.b16 %v579, %v578
        %v597 = vpack.c.b16 %v581, %v580
        %614 = vmatpush.bf16.msra.mxu0 %v589
        %615 = vmatpush.bf16.msra.mxu0 %v588
        %616 = vmatpush.bf16.msra.mxu0 %v587
        %617 = vmatpush.bf16.msra.mxu0 %v586
        %618 = vmatpush.bf16.msra.mxu0 %v585
        %619 = vmatpush.bf16.msra.mxu0 %v584
        %620 = vmatpush.bf16.msra.mxu0 %v583
        %621 = vmatpush.bf16.msra.mxu0 %v582
        %622 = vmatmul.bf16.gmra.mxu0 %v438
        %v623 = vpop.f32.mrf.mxu0
        %v624 = vadd.f32 0.0, %v623
        %v625 = vpop.f32.mrf.mxu0
        %v626 = vadd.f32 0.0, %v625
        %627 = vmatmul.bf16.gmra.mxu0 %v440
        %v628 = vpop.f32.mrf.mxu0
        %v629 = vadd.f32 0.0, %v628
        %v630 = vpop.f32.mrf.mxu0
        %v631 = vadd.f32 0.0, %v630
        %632 = vmatmul.bf16.gmra.mxu0 %v442
        %v633 = vpop.f32.mrf.mxu0
        %v634 = vadd.f32 0.0, %v633
        %v635 = vpop.f32.mrf.mxu0
        %v636 = vadd.f32 0.0, %v635
        %637 = vmatmul.bf16.gmra.mxu0 %v444
        %v638 = vpop.f32.mrf.mxu0
        %v639 = vadd.f32 0.0, %v638
        %v640 = vpop.f32.mrf.mxu0
        %v641 = vadd.f32 0.0, %v640
        %642 = vmatmul.bf16.gmra.mxu0 %v446
        %v643 = vpop.f32.mrf.mxu0
        %v644 = vadd.f32 0.0, %v643
        %v645 = vpop.f32.mrf.mxu0
        %v646 = vadd.f32 0.0, %v645
        %647 = vmatmul.bf16.gmra.mxu0 %v448
        %v648 = vpop.f32.mrf.mxu0
        %v649 = vadd.f32 0.0, %v648
        %v650 = vpop.f32.mrf.mxu0
        %v651 = vadd.f32 0.0, %v650
        %652 = vmatmul.bf16.gmra.mxu0 %v450
        %v653 = vpop.f32.mrf.mxu0
        %v654 = vadd.f32 0.0, %v653
        %v655 = vpop.f32.mrf.mxu0
        %v656 = vadd.f32 0.0, %v655
        %657 = vmatmul.bf16.gmra.mxu0 %v452
        %v658 = vpop.f32.mrf.mxu0
        %v659 = vadd.f32 0.0, %v658
        %v660 = vpop.f32.mrf.mxu0
        %v661 = vadd.f32 0.0, %v660
        %662 = vmatmul.bf16.gmra.mxu0 %v454
        %v663 = vpop.f32.mrf.mxu0
        %v664 = vadd.f32 0.0, %v663
        %v665 = vpop.f32.mrf.mxu0
        %v666 = vadd.f32 0.0, %v665
        %667 = vmatmul.bf16.gmra.mxu0 %v456
        %v668 = vpop.f32.mrf.mxu0
        %v669 = vadd.f32 0.0, %v668
        %v670 = vpop.f32.mrf.mxu0
        %v671 = vadd.f32 0.0, %v670
        %672 = vmatmul.bf16.gmra.mxu0 %v458
        %v673 = vpop.f32.mrf.mxu0
        %v674 = vadd.f32 0.0, %v673
        %v675 = vpop.f32.mrf.mxu0
        %v676 = vadd.f32 0.0, %v675
        %677 = vmatmul.bf16.gmra.mxu0 %v460
        %v678 = vpop.f32.mrf.mxu0
        %v679 = vadd.f32 0.0, %v678
        %v680 = vpop.f32.mrf.mxu0
        %v681 = vadd.f32 0.0, %v680
        %682 = vmatmul.bf16.gmra.mxu0 %v462
        %v683 = vpop.f32.mrf.mxu0
        %v684 = vadd.f32 0.0, %v683
        %v685 = vpop.f32.mrf.mxu0
        %v686 = vadd.f32 0.0, %v685
        %687 = vmatmul.bf16.gmra.mxu0 %v464
        %v688 = vpop.f32.mrf.mxu0
        %v689 = vadd.f32 0.0, %v688
        %v690 = vpop.f32.mrf.mxu0
        %v691 = vadd.f32 0.0, %v690
        %692 = vmatmul.bf16.gmra.mxu0 %v466
        %v693 = vpop.f32.mrf.mxu0
        %v694 = vadd.f32 0.0, %v693
        %v695 = vpop.f32.mrf.mxu0
        %v696 = vadd.f32 0.0, %v695
        %697 = vmatmul.bf16.gmra.mxu0 %v468
        %v698 = vpop.f32.mrf.mxu0
        %v699 = vadd.f32 0.0, %v698
        %v700 = vpop.f32.mrf.mxu0
        %v701 = vadd.f32 0.0, %v700
        %702 = vdwg.mxu0
        %703 = vmatpush.bf16.msra.mxu0 %v597
        %704 = vmatpush.bf16.msra.mxu0 %v596
        %705 = vmatpush.bf16.msra.mxu0 %v595
        %706 = vmatpush.bf16.msra.mxu0 %v594
        %707 = vmatpush.bf16.msra.mxu0 %v593
        %708 = vmatpush.bf16.msra.mxu0 %v592
        %709 = vmatpush.bf16.msra.mxu0 %v591
        %710 = vmatpush.bf16.msra.mxu0 %v590
        %711 = vmatmul.bf16.gmra.mxu0 %v439
        %v712 = vpop.f32.mrf.mxu0
        %v713 = vadd.f32 %v624, %v712
        %v714 = vpop.f32.mrf.mxu0
        %v715 = vadd.f32 %v626, %v714
        %716 = vmatmul.bf16.gmra.mxu0 %v441
        %v717 = vpop.f32.mrf.mxu0
        %v718 = vadd.f32 %v629, %v717
        %v719 = vpop.f32.mrf.mxu0
        %v720 = vadd.f32 %v631, %v719
        %721 = vmatmul.bf16.gmra.mxu0 %v443
        %v722 = vpop.f32.mrf.mxu0
        %v723 = vadd.f32 %v634, %v722
        %v724 = vpop.f32.mrf.mxu0
        %v725 = vadd.f32 %v636, %v724
        %726 = vmatmul.bf16.gmra.mxu0 %v445
        %v727 = vpop.f32.mrf.mxu0
        %v728 = vadd.f32 %v639, %v727
        %v729 = vpop.f32.mrf.mxu0
        %v730 = vadd.f32 %v641, %v729
        %731 = vmatmul.bf16.gmra.mxu0 %v447
        %v732 = vpop.f32.mrf.mxu0
        %v733 = vadd.f32 %v644, %v732
        %v734 = vpop.f32.mrf.mxu0
        %v735 = vadd.f32 %v646, %v734
        %736 = vmatmul.bf16.gmra.mxu0 %v449
        %v737 = vpop.f32.mrf.mxu0
        %v738 = vadd.f32 %v649, %v737
        %v739 = vpop.f32.mrf.mxu0
        %v740 = vadd.f32 %v651, %v739
        %741 = vmatmul.bf16.gmra.mxu0 %v451
        %v742 = vpop.f32.mrf.mxu0
        %v743 = vadd.f32 %v654, %v742
        %v744 = vpop.f32.mrf.mxu0
        %v745 = vadd.f32 %v656, %v744
        %746 = vmatmul.bf16.gmra.mxu0 %v453
        %v747 = vpop.f32.mrf.mxu0
        %v748 = vadd.f32 %v659, %v747
        %v749 = vpop.f32.mrf.mxu0
        %v750 = vadd.f32 %v661, %v749
        %751 = vmatmul.bf16.gmra.mxu0 %v455
        %v752 = vpop.f32.mrf.mxu0
        %v753 = vadd.f32 %v664, %v752
        %v754 = vpop.f32.mrf.mxu0
        %v755 = vadd.f32 %v666, %v754
        %756 = vmatmul.bf16.gmra.mxu0 %v457
        %v757 = vpop.f32.mrf.mxu0
        %v758 = vadd.f32 %v669, %v757
        %v759 = vpop.f32.mrf.mxu0
        %v760 = vadd.f32 %v671, %v759
        %761 = vmatmul.bf16.gmra.mxu0 %v459
        %v762 = vpop.f32.mrf.mxu0
        %v763 = vadd.f32 %v674, %v762
        %v764 = vpop.f32.mrf.mxu0
        %v765 = vadd.f32 %v676, %v764
        %766 = vmatmul.bf16.gmra.mxu0 %v461
        %v767 = vpop.f32.mrf.mxu0
        %v768 = vadd.f32 %v679, %v767
        %v769 = vpop.f32.mrf.mxu0
        %v770 = vadd.f32 %v681, %v769
        %771 = vmatmul.bf16.gmra.mxu0 %v463
        %v772 = vpop.f32.mrf.mxu0
        %v773 = vadd.f32 %v684, %v772
        %v774 = vpop.f32.mrf.mxu0
        %v775 = vadd.f32 %v686, %v774
        %776 = vmatmul.bf16.gmra.mxu0 %v465
        %v777 = vpop.f32.mrf.mxu0
        %v778 = vadd.f32 %v689, %v777
        %v779 = vpop.f32.mrf.mxu0
        %v780 = vadd.f32 %v691, %v779
        %781 = vmatmul.bf16.gmra.mxu0 %v467
        %v782 = vpop.f32.mrf.mxu0
        %v783 = vadd.f32 %v694, %v782
        %v784 = vpop.f32.mrf.mxu0
        %v785 = vadd.f32 %v696, %v784
        %786 = vmatmul.bf16.gmra.mxu0 %v469
        %v787 = vpop.f32.mrf.mxu0
        %v788 = vadd.f32 %v699, %v787
        %v789 = vpop.f32.mrf.mxu0
        %v790 = vadd.f32 %v701, %v789
        %791 = vdwg.mxu0
        %v808 = vunpack.c.l.b16 %v470
        %v809 = vunpack.c.l.b16 %v471
        %v810 = vunpack.c.l.b16 %v472
        %v811 = vunpack.c.l.b16 %v473
        %v812 = vunpack.c.l.b16 %v474
        %v813 = vunpack.c.l.b16 %v475
        %v814 = vunpack.c.l.b16 %v476
        %v815 = vunpack.c.l.b16 %v477
        %v816 = vunpack.c.l.b16 %v478
        %v817 = vunpack.c.l.b16 %v479
        %v818 = vunpack.c.l.b16 %v480
        %v819 = vunpack.c.l.b16 %v481
        %v820 = vunpack.c.l.b16 %v482
        %v821 = vunpack.c.l.b16 %v483
        %v822 = vunpack.c.l.b16 %v484
        %v823 = vunpack.c.l.b16 %v485
        %v824 = vpack.c.b16 %v809, %v808
        %v825 = vpack.c.b16 %v811, %v810
        %v826 = vpack.c.b16 %v813, %v812
        %v827 = vpack.c.b16 %v815, %v814
        %v828 = vpack.c.b16 %v817, %v816
        %v829 = vpack.c.b16 %v819, %v818
        %v830 = vpack.c.b16 %v821, %v820
        %v831 = vpack.c.b16 %v823, %v822
        %840 = vmatpush.bf16.msra.mxu0 %v831
        %841 = vmatpush.bf16.msra.mxu0 %v830
        %842 = vmatpush.bf16.msra.mxu0 %v829
        %843 = vmatpush.bf16.msra.mxu0 %v828
        %844 = vmatpush.bf16.msra.mxu0 %v827
        %845 = vmatpush.bf16.msra.mxu0 %v826
        %846 = vmatpush.bf16.msra.mxu0 %v825
        %847 = vmatpush.bf16.msra.mxu0 %v824
        %848 = vmatmul.bf16.gmra.mxu0 %v358
        %v849 = vpop.f32.mrf.mxu0
        %v850 = vadd.f32 %v713, %v849
        %v851 = vpop.f32.mrf.mxu0
        %v852 = vadd.f32 %v715, %v851
        %853 = vmatmul.bf16.gmra.mxu0 %v359
        %v854 = vpop.f32.mrf.mxu0
        %v855 = vadd.f32 %v718, %v854
        %v856 = vpop.f32.mrf.mxu0
        %v857 = vadd.f32 %v720, %v856
        %858 = vmatmul.bf16.gmra.mxu0 %v360
        %v859 = vpop.f32.mrf.mxu0
        %v860 = vadd.f32 %v723, %v859
        %v861 = vpop.f32.mrf.mxu0
        %v862 = vadd.f32 %v725, %v861
        %863 = vmatmul.bf16.gmra.mxu0 %v361
        %v864 = vpop.f32.mrf.mxu0
        %v865 = vadd.f32 %v728, %v864
        %v866 = vpop.f32.mrf.mxu0
        %v867 = vadd.f32 %v730, %v866
        %868 = vmatmul.bf16.gmra.mxu0 %v362
        %v869 = vpop.f32.mrf.mxu0
        %v870 = vadd.f32 %v733, %v869
        %v871 = vpop.f32.mrf.mxu0
        %v872 = vadd.f32 %v735, %v871
        %873 = vmatmul.bf16.gmra.mxu0 %v363
        %v874 = vpop.f32.mrf.mxu0
        %v875 = vadd.f32 %v738, %v874
        %v876 = vpop.f32.mrf.mxu0
        %v877 = vadd.f32 %v740, %v876
        %878 = vmatmul.bf16.gmra.mxu0 %v364
        %v879 = vpop.f32.mrf.mxu0
        %v880 = vadd.f32 %v743, %v879
        %v881 = vpop.f32.mrf.mxu0
        %v882 = vadd.f32 %v745, %v881
        %883 = vmatmul.bf16.gmra.mxu0 %v365
        %v884 = vpop.f32.mrf.mxu0
        %v885 = vadd.f32 %v748, %v884
        %v886 = vpop.f32.mrf.mxu0
        %v887 = vadd.f32 %v750, %v886
        %888 = vmatmul.bf16.gmra.mxu0 %v366
        %v889 = vpop.f32.mrf.mxu0
        %v890 = vadd.f32 %v753, %v889
        %v891 = vpop.f32.mrf.mxu0
        %v892 = vadd.f32 %v755, %v891
        %893 = vmatmul.bf16.gmra.mxu0 %v367
        %v894 = vpop.f32.mrf.mxu0
        %v895 = vadd.f32 %v758, %v894
        %v896 = vpop.f32.mrf.mxu0
        %v897 = vadd.f32 %v760, %v896
        %898 = vmatmul.bf16.gmra.mxu0 %v368
        %v899 = vpop.f32.mrf.mxu0
        %v900 = vadd.f32 %v763, %v899
        %v901 = vpop.f32.mrf.mxu0
        %v902 = vadd.f32 %v765, %v901
        %903 = vmatmul.bf16.gmra.mxu0 %v369
        %v904 = vpop.f32.mrf.mxu0
        %v905 = vadd.f32 %v768, %v904
        %v906 = vpop.f32.mrf.mxu0
        %v907 = vadd.f32 %v770, %v906
        %908 = vmatmul.bf16.gmra.mxu0 %v370
        %v909 = vpop.f32.mrf.mxu0
        %v910 = vadd.f32 %v773, %v909
        %v911 = vpop.f32.mrf.mxu0
        %v912 = vadd.f32 %v775, %v911
        %913 = vmatmul.bf16.gmra.mxu0 %v371
        %v914 = vpop.f32.mrf.mxu0
        %v915 = vadd.f32 %v778, %v914
        %v916 = vpop.f32.mrf.mxu0
        %v917 = vadd.f32 %v780, %v916
        %918 = vmatmul.bf16.gmra.mxu0 %v372
        %v919 = vpop.f32.mrf.mxu0
        %v920 = vadd.f32 %v783, %v919
        %v921 = vpop.f32.mrf.mxu0
        %v922 = vadd.f32 %v785, %v921
        %923 = vmatmul.bf16.gmra.mxu0 %v373
        %v924 = vpop.f32.mrf.mxu0
        %v925 = vadd.f32 %v788, %v924
        %v926 = vpop.f32.mrf.mxu0
        %v927 = vadd.f32 %v790, %v926
        %928 = vdwg.mxu0
        %v929 = vld [vmem:[%s4] sm:$0x1]
        %v931 = vperm.slane %v929, 0
        %v933 = vadd.f32 %v850, %v931
        %v934 = vadd.f32 %v852, %v931
        %v935 = vadd.f32 %v855, %v931
        %v936 = vadd.f32 %v857, %v931
        %v937 = vadd.f32 %v860, %v931
        %v938 = vadd.f32 %v862, %v931
        %v939 = vadd.f32 %v865, %v931
        %v940 = vadd.f32 %v867, %v931
        %v941 = vadd.f32 %v870, %v931
        %v942 = vadd.f32 %v872, %v931
        %v943 = vadd.f32 %v875, %v931
        %v944 = vadd.f32 %v877, %v931
        %v945 = vadd.f32 %v880, %v931
        %v946 = vadd.f32 %v882, %v931
        %v947 = vadd.f32 %v885, %v931
        %v948 = vadd.f32 %v887, %v931
        %v949 = vadd.f32 %v890, %v931
        %v950 = vadd.f32 %v892, %v931
        %v951 = vadd.f32 %v895, %v931
        %v952 = vadd.f32 %v897, %v931
        %v953 = vadd.f32 %v900, %v931
        %v954 = vadd.f32 %v902, %v931
        %v955 = vadd.f32 %v905, %v931
        %v956 = vadd.f32 %v907, %v931
        %v957 = vadd.f32 %v910, %v931
        %v958 = vadd.f32 %v912, %v931
        %v959 = vadd.f32 %v915, %v931
        %v960 = vadd.f32 %v917, %v931
        %v961 = vadd.f32 %v920, %v931
        %v962 = vadd.f32 %v922, %v931
        %v963 = vadd.f32 %v925, %v931
        %v964 = vadd.f32 %v927, %v931
        %v965 = vmax.f32 %v933, 0.0
        %v966 = vmax.f32 %v934, 0.0
        %v967 = vmax.f32 %v935, 0.0
        %v968 = vmax.f32 %v936, 0.0
        %v969 = vmax.f32 %v937, 0.0
        %v970 = vmax.f32 %v938, 0.0
        %v971 = vmax.f32 %v939, 0.0
        %v972 = vmax.f32 %v940, 0.0
        %v973 = vmax.f32 %v941, 0.0
        %v974 = vmax.f32 %v942, 0.0
        %v975 = vmax.f32 %v943, 0.0
        %v976 = vmax.f32 %v944, 0.0
        %v977 = vmax.f32 %v945, 0.0
        %v978 = vmax.f32 %v946, 0.0
        %v979 = vmax.f32 %v947, 0.0
        %v980 = vmax.f32 %v948, 0.0
        %v981 = vmax.f32 %v949, 0.0
        %v982 = vmax.f32 %v950, 0.0
        %v983 = vmax.f32 %v951, 0.0
        %v984 = vmax.f32 %v952, 0.0
        %v985 = vmax.f32 %v953, 0.0
        %v986 = vmax.f32 %v954, 0.0
        %v987 = vmax.f32 %v955, 0.0
        %v988 = vmax.f32 %v956, 0.0
        %v989 = vmax.f32 %v957, 0.0
        %v990 = vmax.f32 %v958, 0.0
        %v991 = vmax.f32 %v959, 0.0
        %v992 = vmax.f32 %v960, 0.0
        %v993 = vmax.f32 %v961, 0.0
        %v994 = vmax.f32 %v962, 0.0
        %v995 = vmax.f32 %v963, 0.0
        %v996 = vmax.f32 %v964, 0.0
        %v997 = vpack.c.bf16 %v966, %v965
        %v998 = vpack.c.bf16 %v968, %v967
        %v999 = vpack.c.bf16 %v970, %v969
        %v1000 = vpack.c.bf16 %v972, %v971
        %v1001 = vpack.c.bf16 %v974, %v973
        %v1002 = vpack.c.bf16 %v976, %v975
        %v1003 = vpack.c.bf16 %v978, %v977
        %v1004 = vpack.c.bf16 %v980, %v979
        %v1005 = vpack.c.bf16 %v982, %v981
        %v1006 = vpack.c.bf16 %v984, %v983
        %v1007 = vpack.c.bf16 %v986, %v985
        %v1008 = vpack.c.bf16 %v988, %v987
        %v1009 = vpack.c.bf16 %v990, %v989
        %v1010 = vpack.c.bf16 %v992, %v991
        %v1011 = vpack.c.bf16 %v994, %v993
        %v1012 = vpack.c.bf16 %v996, %v995
        %v1013 = vld [vmem:[%s5] sm:$0xf]
        %v1014 = vld [vmem:[%s5 + $0x4] sm:$0xf]
        %v1015 = vld [vmem:[%s5 + $0x8] sm:$0xf]
        %v1016 = vld [vmem:[%s5 + $0xc] sm:$0xf]
        %v1017 = vld [vmem:[%s5 + $0x10] sm:$0xf]
        %v1018 = vld [vmem:[%s5 + $0x14] sm:$0xf]
        %v1019 = vld [vmem:[%s5 + $0x18] sm:$0xf]
        %v1020 = vld [vmem:[%s5 + $0x1c] sm:$0xf]
        %v1021 = vld [vmem:[%s5 + $0x20] sm:$0xf]
        %v1022 = vld [vmem:[%s5 + $0x24] sm:$0xf]
        %v1023 = vld [vmem:[%s5 + $0x28] sm:$0xf]
        %v1024 = vld [vmem:[%s5 + $0x2c] sm:$0xf]
        %v1025 = vld [vmem:[%s5 + $0x30] sm:$0xf]
        %v1026 = vld [vmem:[%s5 + $0x34] sm:$0xf]
        %v1027 = vld [vmem:[%s5 + $0x38] sm:$0xf]
        %v1028 = vld [vmem:[%s5 + $0x3c] sm:$0xf]
        %v1029 = vld [vmem:[%s6] sm:$0x1]
        %v1031 = vperm.slane %v1029, 0
        %v1049 = vunpack.c.l.b16 %v1013
        %v1050 = vunpack.c.l.b16 %v1014
        %v1051 = vunpack.c.l.b16 %v1015
        %v1052 = vunpack.c.l.b16 %v1016
        %v1053 = vunpack.c.l.b16 %v1017
        %v1054 = vunpack.c.l.b16 %v1018
        %v1055 = vunpack.c.l.b16 %v1019
        %v1056 = vunpack.c.l.b16 %v1020
        %v1057 = vunpack.c.l.b16 %v1021
        %v1058 = vunpack.c.l.b16 %v1022
        %v1059 = vunpack.c.l.b16 %v1023
        %v1060 = vunpack.c.l.b16 %v1024
        %v1061 = vunpack.c.l.b16 %v1025
        %v1062 = vunpack.c.l.b16 %v1026
        %v1063 = vunpack.c.l.b16 %v1027
        %v1064 = vunpack.c.l.b16 %v1028
        %v1065 = vpack.c.b16 %v1050, %v1049
        %v1066 = vpack.c.b16 %v1052, %v1051
        %v1067 = vpack.c.b16 %v1054, %v1053
        %v1068 = vpack.c.b16 %v1056, %v1055
        %v1069 = vpack.c.b16 %v1058, %v1057
        %v1070 = vpack.c.b16 %v1060, %v1059
        %v1071 = vpack.c.b16 %v1062, %v1061
        %v1072 = vpack.c.b16 %v1064, %v1063
        %1081 = vmatpush.bf16.msra.mxu0 %v1072
        %1082 = vmatpush.bf16.msra.mxu0 %v1071
        %1083 = vmatpush.bf16.msra.mxu0 %v1070
        %1084 = vmatpush.bf16.msra.mxu0 %v1069
        %1085 = vmatpush.bf16.msra.mxu0 %v1068
        %1086 = vmatpush.bf16.msra.mxu0 %v1067
        %1087 = vmatpush.bf16.msra.mxu0 %v1066
        %1088 = vmatpush.bf16.msra.mxu0 %v1065
        %1089 = vmatmul.bf16.gmra.mxu0 %v997
        %v1090 = vpop.f32.mrf.mxu0
        %v1091 = vadd.f32 %v1031, %v1090
        %v1092 = vpop.f32.mrf.mxu0
        %v1093 = vadd.f32 %v1031, %v1092
        %1094 = vmatmul.bf16.gmra.mxu0 %v998
        %v1095 = vpop.f32.mrf.mxu0
        %v1096 = vadd.f32 %v1031, %v1095
        %v1097 = vpop.f32.mrf.mxu0
        %v1098 = vadd.f32 %v1031, %v1097
        %1099 = vmatmul.bf16.gmra.mxu0 %v999
        %v1100 = vpop.f32.mrf.mxu0
        %v1101 = vadd.f32 %v1031, %v1100
        %v1102 = vpop.f32.mrf.mxu0
        %v1103 = vadd.f32 %v1031, %v1102
        %1104 = vmatmul.bf16.gmra.mxu0 %v1000
        %v1105 = vpop.f32.mrf.mxu0
        %v1106 = vadd.f32 %v1031, %v1105
        %v1107 = vpop.f32.mrf.mxu0
        %v1108 = vadd.f32 %v1031, %v1107
        %1109 = vmatmul.bf16.gmra.mxu0 %v1001
        %v1110 = vpop.f32.mrf.mxu0
        %v1111 = vadd.f32 %v1031, %v1110
        %v1112 = vpop.f32.mrf.mxu0
        %v1113 = vadd.f32 %v1031, %v1112
        %1114 = vmatmul.bf16.gmra.mxu0 %v1002
        %v1115 = vpop.f32.mrf.mxu0
        %v1116 = vadd.f32 %v1031, %v1115
        %v1117 = vpop.f32.mrf.mxu0
        %v1118 = vadd.f32 %v1031, %v1117
        %1119 = vmatmul.bf16.gmra.mxu0 %v1003
        %v1120 = vpop.f32.mrf.mxu0
        %v1121 = vadd.f32 %v1031, %v1120
        %v1122 = vpop.f32.mrf.mxu0
        %v1123 = vadd.f32 %v1031, %v1122
        %1124 = vmatmul.bf16.gmra.mxu0 %v1004
        %v1125 = vpop.f32.mrf.mxu0
        %v1126 = vadd.f32 %v1031, %v1125
        %v1127 = vpop.f32.mrf.mxu0
        %v1128 = vadd.f32 %v1031, %v1127
        %1129 = vmatmul.bf16.gmra.mxu0 %v1005
        %v1130 = vpop.f32.mrf.mxu0
        %v1131 = vadd.f32 %v1031, %v1130
        %v1132 = vpop.f32.mrf.mxu0
        %v1133 = vadd.f32 %v1031, %v1132
        %1134 = vmatmul.bf16.gmra.mxu0 %v1006
        %v1135 = vpop.f32.mrf.mxu0
        %v1136 = vadd.f32 %v1031, %v1135
        %v1137 = vpop.f32.mrf.mxu0
        %v1138 = vadd.f32 %v1031, %v1137
        %1139 = vmatmul.bf16.gmra.mxu0 %v1007
        %v1140 = vpop.f32.mrf.mxu0
        %v1141 = vadd.f32 %v1031, %v1140
        %v1142 = vpop.f32.mrf.mxu0
        %v1143 = vadd.f32 %v1031, %v1142
        %1144 = vmatmul.bf16.gmra.mxu0 %v1008
        %v1145 = vpop.f32.mrf.mxu0
        %v1146 = vadd.f32 %v1031, %v1145
        %v1147 = vpop.f32.mrf.mxu0
        %v1148 = vadd.f32 %v1031, %v1147
        %1149 = vmatmul.bf16.gmra.mxu0 %v1009
        %v1150 = vpop.f32.mrf.mxu0
        %v1151 = vadd.f32 %v1031, %v1150
        %v1152 = vpop.f32.mrf.mxu0
        %v1153 = vadd.f32 %v1031, %v1152
        %1154 = vmatmul.bf16.gmra.mxu0 %v1010
        %v1155 = vpop.f32.mrf.mxu0
        %v1156 = vadd.f32 %v1031, %v1155
        %v1157 = vpop.f32.mrf.mxu0
        %v1158 = vadd.f32 %v1031, %v1157
        %1159 = vmatmul.bf16.gmra.mxu0 %v1011
        %v1160 = vpop.f32.mrf.mxu0
        %v1161 = vadd.f32 %v1031, %v1160
        %v1162 = vpop.f32.mrf.mxu0
        %v1163 = vadd.f32 %v1031, %v1162
        %1164 = vmatmul.bf16.gmra.mxu0 %v1012
        %v1165 = vpop.f32.mrf.mxu0
        %v1166 = vadd.f32 %v1031, %v1165
        %v1167 = vpop.f32.mrf.mxu0
        %v1168 = vadd.f32 %v1031, %v1167
        %1169 = vdwg.mxu0
        %v1170 = vxor.u32 %v1091, 2147483648
        %v1171 = vxor.u32 %v1093, 2147483648
        %v1172 = vxor.u32 %v1096, 2147483648
        %v1173 = vxor.u32 %v1098, 2147483648
        %v1174 = vxor.u32 %v1101, 2147483648
        %v1175 = vxor.u32 %v1103, 2147483648
        %v1176 = vxor.u32 %v1106, 2147483648
        %v1177 = vxor.u32 %v1108, 2147483648
        %v1178 = vxor.u32 %v1111, 2147483648
        %v1179 = vxor.u32 %v1113, 2147483648
        %v1180 = vxor.u32 %v1116, 2147483648
        %v1181 = vxor.u32 %v1118, 2147483648
        %v1182 = vxor.u32 %v1121, 2147483648
        %v1183 = vxor.u32 %v1123, 2147483648
        %v1184 = vxor.u32 %v1126, 2147483648
        %v1185 = vxor.u32 %v1128, 2147483648
        %v1186 = vxor.u32 %v1131, 2147483648
        %v1187 = vxor.u32 %v1133, 2147483648
        %v1188 = vxor.u32 %v1136, 2147483648
        %v1189 = vxor.u32 %v1138, 2147483648
        %v1190 = vxor.u32 %v1141, 2147483648
        %v1191 = vxor.u32 %v1143, 2147483648
        %v1192 = vxor.u32 %v1146, 2147483648
        %v1193 = vxor.u32 %v1148, 2147483648
        %v1194 = vxor.u32 %v1151, 2147483648
        %v1195 = vxor.u32 %v1153, 2147483648
        %v1196 = vxor.u32 %v1156, 2147483648
        %v1197 = vxor.u32 %v1158, 2147483648
        %v1198 = vxor.u32 %v1161, 2147483648
        %v1199 = vxor.u32 %v1163, 2147483648
        %v1200 = vxor.u32 %v1166, 2147483648
        %v1201 = vxor.u32 %v1168, 2147483648
        %v1202 = vmul.f32 %v1170, 1.442695
        %v1203 = vpow.pop %v1202
        %v1204 = vmul.f32 %v1171, 1.442695
        %v1205 = vpow.pop %v1204
        %v1206 = vmul.f32 %v1172, 1.442695
        %v1207 = vpow.pop %v1206
        %v1208 = vmul.f32 %v1173, 1.442695
        %v1209 = vpow.pop %v1208
        %v1210 = vmul.f32 %v1174, 1.442695
        %v1211 = vpow.pop %v1210
        %v1212 = vmul.f32 %v1175, 1.442695
        %v1213 = vpow.pop %v1212
        %v1214 = vmul.f32 %v1176, 1.442695
        %v1215 = vpow.pop %v1214
        %v1216 = vmul.f32 %v1177, 1.442695
        %v1217 = vpow.pop %v1216
        %v1218 = vmul.f32 %v1178, 1.442695
        %v1219 = vpow.pop %v1218
        %v1220 = vmul.f32 %v1179, 1.442695
        %v1221 = vpow.pop %v1220
        %v1222 = vmul.f32 %v1180, 1.442695
        %v1223 = vpow.pop %v1222
        %v1224 = vmul.f32 %v1181, 1.442695
        %v1225 = vpow.pop %v1224
        %v1226 = vmul.f32 %v1182, 1.442695
        %v1227 = vpow.pop %v1226
        %v1228 = vmul.f32 %v1183, 1.442695
        %v1229 = vpow.pop %v1228
        %v1230 = vmul.f32 %v1184, 1.442695
        %v1231 = vpow.pop %v1230
        %v1232 = vmul.f32 %v1185, 1.442695
        %v1233 = vpow.pop %v1232
        %v1234 = vmul.f32 %v1186, 1.442695
        %v1235 = vpow.pop %v1234
        %v1236 = vmul.f32 %v1187, 1.442695
        %v1237 = vpow.pop %v1236
        %v1238 = vmul.f32 %v1188, 1.442695
        %v1239 = vpow.pop %v1238
        %v1240 = vmul.f32 %v1189, 1.442695
        %v1241 = vpow.pop %v1240
        %v1242 = vmul.f32 %v1190, 1.442695
        %v1243 = vpow.pop %v1242
        %v1244 = vmul.f32 %v1191, 1.442695
        %v1245 = vpow.pop %v1244
        %v1246 = vmul.f32 %v1192, 1.442695
        %v1247 = vpow.pop %v1246
        %v1248 = vmul.f32 %v1193, 1.442695
        %v1249 = vpow.pop %v1248
        %v1250 = vmul.f32 %v1194, 1.442695
        %v1251 = vpow.pop %v1250
        %v1252 = vmul.f32 %v1195, 1.442695
        %v1253 = vpow.pop %v1252
        %v1254 = vmul.f32 %v1196, 1.442695
        %v1255 = vpow.pop %v1254
        %v1256 = vmul.f32 %v1197, 1.442695
        %v1257 = vpow.pop %v1256
        %v1258 = vmul.f32 %v1198, 1.442695
        %v1259 = vpow.pop %v1258
        %v1260 = vmul.f32 %v1199, 1.442695
        %v1261 = vpow.pop %v1260
        %v1262 = vmul.f32 %v1200, 1.442695
        %v1263 = vpow.pop %v1262
        %v1264 = vmul.f32 %v1201, 1.442695
        %v1265 = vpow.pop %v1264
        %v1266 = vadd.f32 %v1203, 1.0
        %v1267 = vadd.f32 %v1205, 1.0
        %v1268 = vadd.f32 %v1207, 1.0
        %v1269 = vadd.f32 %v1209, 1.0
        %v1270 = vadd.f32 %v1211, 1.0
        %v1271 = vadd.f32 %v1213, 1.0
        %v1272 = vadd.f32 %v1215, 1.0
        %v1273 = vadd.f32 %v1217, 1.0
        %v1274 = vadd.f32 %v1219, 1.0
        %v1275 = vadd.f32 %v1221, 1.0
        %v1276 = vadd.f32 %v1223, 1.0
        %v1277 = vadd.f32 %v1225, 1.0
        %v1278 = vadd.f32 %v1227, 1.0
        %v1279 = vadd.f32 %v1229, 1.0
        %v1280 = vadd.f32 %v1231, 1.0
        %v1281 = vadd.f32 %v1233, 1.0
        %v1282 = vadd.f32 %v1235, 1.0
        %v1283 = vadd.f32 %v1237, 1.0
        %v1284 = vadd.f32 %v1239, 1.0
        %v1285 = vadd.f32 %v1241, 1.0
        %v1286 = vadd.f32 %v1243, 1.0
        %v1287 = vadd.f32 %v1245, 1.0
        %v1288 = vadd.f32 %v1247, 1.0
        %v1289 = vadd.f32 %v1249, 1.0
        %v1290 = vadd.f32 %v1251, 1.0
        %v1291 = vadd.f32 %v1253, 1.0
        %v1292 = vadd.f32 %v1255, 1.0
        %v1293 = vadd.f32 %v1257, 1.0
        %v1294 = vadd.f32 %v1259, 1.0
        %v1295 = vadd.f32 %v1261, 1.0
        %v1296 = vadd.f32 %v1263, 1.0
        %v1297 = vadd.f32 %v1265, 1.0
        %v1298 = vrcp.pop %v1266
        %v1299 = vmul.f32 %v1266, %v1298
        %v1300 = vsub.f32 1.0, %v1299
        %v1301 = vmul.f32 %v1298, %v1300
        %v1302 = vadd.f32 %v1298, %v1301
        %vm1303 = vweird.f32 %v1266
        %vm1304 = vweird.f32 %v1298
        %vm1305 = vmor %vm1303, %vm1304
        %v1306 = vsel %vm1305, %v1298, %v1302
        %v1307 = vand.u32 2147483647, %v1266
        %vm1308 = vcmp.eq.f32.partialorder %v1307, 8.507059e+37
        %v1309 = vand.u32 %v1266, 2147483648
        %v1310 = vor.u32 1.1754944e-38, %v1309
        %v1311 = vsel %vm1308, %v1310, %v1306
        %v1312 = vmul.f32 1.0, %v1311
        %v1313 = vrcp.pop %v1267
        %v1314 = vmul.f32 %v1267, %v1313
        %v1315 = vsub.f32 1.0, %v1314
        %v1316 = vmul.f32 %v1313, %v1315
        %v1317 = vadd.f32 %v1313, %v1316
        %vm1318 = vweird.f32 %v1267
        %vm1319 = vweird.f32 %v1313
        %vm1320 = vmor %vm1318, %vm1319
        %v1321 = vsel %vm1320, %v1313, %v1317
        %v1322 = vand.u32 2147483647, %v1267
        %vm1323 = vcmp.eq.f32.partialorder %v1322, 8.507059e+37
        %v1324 = vand.u32 %v1267, 2147483648
        %v1325 = vor.u32 1.1754944e-38, %v1324
        %v1326 = vsel %vm1323, %v1325, %v1321
        %v1327 = vmul.f32 1.0, %v1326
        %v1328 = vrcp.pop %v1268
        %v1329 = vmul.f32 %v1268, %v1328
        %v1330 = vsub.f32 1.0, %v1329
        %v1331 = vmul.f32 %v1328, %v1330
        %v1332 = vadd.f32 %v1328, %v1331
        %vm1333 = vweird.f32 %v1268
        %vm1334 = vweird.f32 %v1328
        %vm1335 = vmor %vm1333, %vm1334
        %v1336 = vsel %vm1335, %v1328, %v1332
        %v1337 = vand.u32 2147483647, %v1268
        %vm1338 = vcmp.eq.f32.partialorder %v1337, 8.507059e+37
        %v1339 = vand.u32 %v1268, 2147483648
        %v1340 = vor.u32 1.1754944e-38, %v1339
        %v1341 = vsel %vm1338, %v1340, %v1336
        %v1342 = vmul.f32 1.0, %v1341
        %v1343 = vrcp.pop %v1269
        %v1344 = vmul.f32 %v1269, %v1343
        %v1345 = vsub.f32 1.0, %v1344
        %v1346 = vmul.f32 %v1343, %v1345
        %v1347 = vadd.f32 %v1343, %v1346
        %vm1348 = vweird.f32 %v1269
        %vm1349 = vweird.f32 %v1343
        %vm1350 = vmor %vm1348, %vm1349
        %v1351 = vsel %vm1350, %v1343, %v1347
        %v1352 = vand.u32 2147483647, %v1269
        %vm1353 = vcmp.eq.f32.partialorder %v1352, 8.507059e+37
        %v1354 = vand.u32 %v1269, 2147483648
        %v1355 = vor.u32 1.1754944e-38, %v1354
        %v1356 = vsel %vm1353, %v1355, %v1351
        %v1357 = vmul.f32 1.0, %v1356
        %v1358 = vrcp.pop %v1270
        %v1359 = vmul.f32 %v1270, %v1358
        %v1360 = vsub.f32 1.0, %v1359
        %v1361 = vmul.f32 %v1358, %v1360
        %v1362 = vadd.f32 %v1358, %v1361
        %vm1363 = vweird.f32 %v1270
        %vm1364 = vweird.f32 %v1358
        %vm1365 = vmor %vm1363, %vm1364
        %v1366 = vsel %vm1365, %v1358, %v1362
        %v1367 = vand.u32 2147483647, %v1270
        %vm1368 = vcmp.eq.f32.partialorder %v1367, 8.507059e+37
        %v1369 = vand.u32 %v1270, 2147483648
        %v1370 = vor.u32 1.1754944e-38, %v1369
        %v1371 = vsel %vm1368, %v1370, %v1366
        %v1372 = vmul.f32 1.0, %v1371
        %v1373 = vrcp.pop %v1271
        %v1374 = vmul.f32 %v1271, %v1373
        %v1375 = vsub.f32 1.0, %v1374
        %v1376 = vmul.f32 %v1373, %v1375
        %v1377 = vadd.f32 %v1373, %v1376
        %vm1378 = vweird.f32 %v1271
        %vm1379 = vweird.f32 %v1373
        %vm1380 = vmor %vm1378, %vm1379
        %v1381 = vsel %vm1380, %v1373, %v1377
        %v1382 = vand.u32 2147483647, %v1271
        %vm1383 = vcmp.eq.f32.partialorder %v1382, 8.507059e+37
        %v1384 = vand.u32 %v1271, 2147483648
        %v1385 = vor.u32 1.1754944e-38, %v1384
        %v1386 = vsel %vm1383, %v1385, %v1381
        %v1387 = vmul.f32 1.0, %v1386
        %v1388 = vrcp.pop %v1272
        %v1389 = vmul.f32 %v1272, %v1388
        %v1390 = vsub.f32 1.0, %v1389
        %v1391 = vmul.f32 %v1388, %v1390
        %v1392 = vadd.f32 %v1388, %v1391
        %vm1393 = vweird.f32 %v1272
        %vm1394 = vweird.f32 %v1388
        %vm1395 = vmor %vm1393, %vm1394
        %v1396 = vsel %vm1395, %v1388, %v1392
        %v1397 = vand.u32 2147483647, %v1272
        %vm1398 = vcmp.eq.f32.partialorder %v1397, 8.507059e+37
        %v1399 = vand.u32 %v1272, 2147483648
        %v1400 = vor.u32 1.1754944e-38, %v1399
        %v1401 = vsel %vm1398, %v1400, %v1396
        %v1402 = vmul.f32 1.0, %v1401
        %v1403 = vrcp.pop %v1273
        %v1404 = vmul.f32 %v1273, %v1403
        %v1405 = vsub.f32 1.0, %v1404
        %v1406 = vmul.f32 %v1403, %v1405
        %v1407 = vadd.f32 %v1403, %v1406
        %vm1408 = vweird.f32 %v1273
        %vm1409 = vweird.f32 %v1403
        %vm1410 = vmor %vm1408, %vm1409
        %v1411 = vsel %vm1410, %v1403, %v1407
        %v1412 = vand.u32 2147483647, %v1273
        %vm1413 = vcmp.eq.f32.partialorder %v1412, 8.507059e+37
        %v1414 = vand.u32 %v1273, 2147483648
        %v1415 = vor.u32 1.1754944e-38, %v1414
        %v1416 = vsel %vm1413, %v1415, %v1411
        %v1417 = vmul.f32 1.0, %v1416
        %v1418 = vrcp.pop %v1274
        %v1419 = vmul.f32 %v1274, %v1418
        %v1420 = vsub.f32 1.0, %v1419
        %v1421 = vmul.f32 %v1418, %v1420
        %v1422 = vadd.f32 %v1418, %v1421
        %vm1423 = vweird.f32 %v1274
        %vm1424 = vweird.f32 %v1418
        %vm1425 = vmor %vm1423, %vm1424
        %v1426 = vsel %vm1425, %v1418, %v1422
        %v1427 = vand.u32 2147483647, %v1274
        %vm1428 = vcmp.eq.f32.partialorder %v1427, 8.507059e+37
        %v1429 = vand.u32 %v1274, 2147483648
        %v1430 = vor.u32 1.1754944e-38, %v1429
        %v1431 = vsel %vm1428, %v1430, %v1426
        %v1432 = vmul.f32 1.0, %v1431
        %v1433 = vrcp.pop %v1275
        %v1434 = vmul.f32 %v1275, %v1433
        %v1435 = vsub.f32 1.0, %v1434
        %v1436 = vmul.f32 %v1433, %v1435
        %v1437 = vadd.f32 %v1433, %v1436
        %vm1438 = vweird.f32 %v1275
        %vm1439 = vweird.f32 %v1433
        %vm1440 = vmor %vm1438, %vm1439
        %v1441 = vsel %vm1440, %v1433, %v1437
        %v1442 = vand.u32 2147483647, %v1275
        %vm1443 = vcmp.eq.f32.partialorder %v1442, 8.507059e+37
        %v1444 = vand.u32 %v1275, 2147483648
        %v1445 = vor.u32 1.1754944e-38, %v1444
        %v1446 = vsel %vm1443, %v1445, %v1441
        %v1447 = vmul.f32 1.0, %v1446
        %v1448 = vrcp.pop %v1276
        %v1449 = vmul.f32 %v1276, %v1448
        %v1450 = vsub.f32 1.0, %v1449
        %v1451 = vmul.f32 %v1448, %v1450
        %v1452 = vadd.f32 %v1448, %v1451
        %vm1453 = vweird.f32 %v1276
        %vm1454 = vweird.f32 %v1448
        %vm1455 = vmor %vm1453, %vm1454
        %v1456 = vsel %vm1455, %v1448, %v1452
        %v1457 = vand.u32 2147483647, %v1276
        %vm1458 = vcmp.eq.f32.partialorder %v1457, 8.507059e+37
        %v1459 = vand.u32 %v1276, 2147483648
        %v1460 = vor.u32 1.1754944e-38, %v1459
        %v1461 = vsel %vm1458, %v1460, %v1456
        %v1462 = vmul.f32 1.0, %v1461
        %v1463 = vrcp.pop %v1277
        %v1464 = vmul.f32 %v1277, %v1463
        %v1465 = vsub.f32 1.0, %v1464
        %v1466 = vmul.f32 %v1463, %v1465
        %v1467 = vadd.f32 %v1463, %v1466
        %vm1468 = vweird.f32 %v1277
        %vm1469 = vweird.f32 %v1463
        %vm1470 = vmor %vm1468, %vm1469
        %v1471 = vsel %vm1470, %v1463, %v1467
        %v1472 = vand.u32 2147483647, %v1277
        %vm1473 = vcmp.eq.f32.partialorder %v1472, 8.507059e+37
        %v1474 = vand.u32 %v1277, 2147483648
        %v1475 = vor.u32 1.1754944e-38, %v1474
        %v1476 = vsel %vm1473, %v1475, %v1471
        %v1477 = vmul.f32 1.0, %v1476
        %v1478 = vrcp.pop %v1278
        %v1479 = vmul.f32 %v1278, %v1478
        %v1480 = vsub.f32 1.0, %v1479
        %v1481 = vmul.f32 %v1478, %v1480
        %v1482 = vadd.f32 %v1478, %v1481
        %vm1483 = vweird.f32 %v1278
        %vm1484 = vweird.f32 %v1478
        %vm1485 = vmor %vm1483, %vm1484
        %v1486 = vsel %vm1485, %v1478, %v1482
        %v1487 = vand.u32 2147483647, %v1278
        %vm1488 = vcmp.eq.f32.partialorder %v1487, 8.507059e+37
        %v1489 = vand.u32 %v1278, 2147483648
        %v1490 = vor.u32 1.1754944e-38, %v1489
        %v1491 = vsel %vm1488, %v1490, %v1486
        %v1492 = vmul.f32 1.0, %v1491
        %v1493 = vrcp.pop %v1279
        %v1494 = vmul.f32 %v1279, %v1493
        %v1495 = vsub.f32 1.0, %v1494
        %v1496 = vmul.f32 %v1493, %v1495
        %v1497 = vadd.f32 %v1493, %v1496
        %vm1498 = vweird.f32 %v1279
        %vm1499 = vweird.f32 %v1493
        %vm1500 = vmor %vm1498, %vm1499
        %v1501 = vsel %vm1500, %v1493, %v1497
        %v1502 = vand.u32 2147483647, %v1279
        %vm1503 = vcmp.eq.f32.partialorder %v1502, 8.507059e+37
        %v1504 = vand.u32 %v1279, 2147483648
        %v1505 = vor.u32 1.1754944e-38, %v1504
        %v1506 = vsel %vm1503, %v1505, %v1501
        %v1507 = vmul.f32 1.0, %v1506
        %v1508 = vrcp.pop %v1280
        %v1509 = vmul.f32 %v1280, %v1508
        %v1510 = vsub.f32 1.0, %v1509
        %v1511 = vmul.f32 %v1508, %v1510
        %v1512 = vadd.f32 %v1508, %v1511
        %vm1513 = vweird.f32 %v1280
        %vm1514 = vweird.f32 %v1508
        %vm1515 = vmor %vm1513, %vm1514
        %v1516 = vsel %vm1515, %v1508, %v1512
        %v1517 = vand.u32 2147483647, %v1280
        %vm1518 = vcmp.eq.f32.partialorder %v1517, 8.507059e+37
        %v1519 = vand.u32 %v1280, 2147483648
        %v1520 = vor.u32 1.1754944e-38, %v1519
        %v1521 = vsel %vm1518, %v1520, %v1516
        %v1522 = vmul.f32 1.0, %v1521
        %v1523 = vrcp.pop %v1281
        %v1524 = vmul.f32 %v1281, %v1523
        %v1525 = vsub.f32 1.0, %v1524
        %v1526 = vmul.f32 %v1523, %v1525
        %v1527 = vadd.f32 %v1523, %v1526
        %vm1528 = vweird.f32 %v1281
        %vm1529 = vweird.f32 %v1523
        %vm1530 = vmor %vm1528, %vm1529
        %v1531 = vsel %vm1530, %v1523, %v1527
        %v1532 = vand.u32 2147483647, %v1281
        %vm1533 = vcmp.eq.f32.partialorder %v1532, 8.507059e+37
        %v1534 = vand.u32 %v1281, 2147483648
        %v1535 = vor.u32 1.1754944e-38, %v1534
        %v1536 = vsel %vm1533, %v1535, %v1531
        %v1537 = vmul.f32 1.0, %v1536
        %v1538 = vrcp.pop %v1282
        %v1539 = vmul.f32 %v1282, %v1538
        %v1540 = vsub.f32 1.0, %v1539
        %v1541 = vmul.f32 %v1538, %v1540
        %v1542 = vadd.f32 %v1538, %v1541
        %vm1543 = vweird.f32 %v1282
        %vm1544 = vweird.f32 %v1538
        %vm1545 = vmor %vm1543, %vm1544
        %v1546 = vsel %vm1545, %v1538, %v1542
        %v1547 = vand.u32 2147483647, %v1282
        %vm1548 = vcmp.eq.f32.partialorder %v1547, 8.507059e+37
        %v1549 = vand.u32 %v1282, 2147483648
        %v1550 = vor.u32 1.1754944e-38, %v1549
        %v1551 = vsel %vm1548, %v1550, %v1546
        %v1552 = vmul.f32 1.0, %v1551
        %v1553 = vrcp.pop %v1283
        %v1554 = vmul.f32 %v1283, %v1553
        %v1555 = vsub.f32 1.0, %v1554
        %v1556 = vmul.f32 %v1553, %v1555
        %v1557 = vadd.f32 %v1553, %v1556
        %vm1558 = vweird.f32 %v1283
        %vm1559 = vweird.f32 %v1553
        %vm1560 = vmor %vm1558, %vm1559
        %v1561 = vsel %vm1560, %v1553, %v1557
        %v1562 = vand.u32 2147483647, %v1283
        %vm1563 = vcmp.eq.f32.partialorder %v1562, 8.507059e+37
        %v1564 = vand.u32 %v1283, 2147483648
        %v1565 = vor.u32 1.1754944e-38, %v1564
        %v1566 = vsel %vm1563, %v1565, %v1561
        %v1567 = vmul.f32 1.0, %v1566
        %v1568 = vrcp.pop %v1284
        %v1569 = vmul.f32 %v1284, %v1568
        %v1570 = vsub.f32 1.0, %v1569
        %v1571 = vmul.f32 %v1568, %v1570
        %v1572 = vadd.f32 %v1568, %v1571
        %vm1573 = vweird.f32 %v1284
        %vm1574 = vweird.f32 %v1568
        %vm1575 = vmor %vm1573, %vm1574
        %v1576 = vsel %vm1575, %v1568, %v1572
        %v1577 = vand.u32 2147483647, %v1284
        %vm1578 = vcmp.eq.f32.partialorder %v1577, 8.507059e+37
        %v1579 = vand.u32 %v1284, 2147483648
        %v1580 = vor.u32 1.1754944e-38, %v1579
        %v1581 = vsel %vm1578, %v1580, %v1576
        %v1582 = vmul.f32 1.0, %v1581
        %v1583 = vrcp.pop %v1285
        %v1584 = vmul.f32 %v1285, %v1583
        %v1585 = vsub.f32 1.0, %v1584
        %v1586 = vmul.f32 %v1583, %v1585
        %v1587 = vadd.f32 %v1583, %v1586
        %vm1588 = vweird.f32 %v1285
        %vm1589 = vweird.f32 %v1583
        %vm1590 = vmor %vm1588, %vm1589
        %v1591 = vsel %vm1590, %v1583, %v1587
        %v1592 = vand.u32 2147483647, %v1285
        %vm1593 = vcmp.eq.f32.partialorder %v1592, 8.507059e+37
        %v1594 = vand.u32 %v1285, 2147483648
        %v1595 = vor.u32 1.1754944e-38, %v1594
        %v1596 = vsel %vm1593, %v1595, %v1591
        %v1597 = vmul.f32 1.0, %v1596
        %v1598 = vrcp.pop %v1286
        %v1599 = vmul.f32 %v1286, %v1598
        %v1600 = vsub.f32 1.0, %v1599
        %v1601 = vmul.f32 %v1598, %v1600
        %v1602 = vadd.f32 %v1598, %v1601
        %vm1603 = vweird.f32 %v1286
        %vm1604 = vweird.f32 %v1598
        %vm1605 = vmor %vm1603, %vm1604
        %v1606 = vsel %vm1605, %v1598, %v1602
        %v1607 = vand.u32 2147483647, %v1286
        %vm1608 = vcmp.eq.f32.partialorder %v1607, 8.507059e+37
        %v1609 = vand.u32 %v1286, 2147483648
        %v1610 = vor.u32 1.1754944e-38, %v1609
        %v1611 = vsel %vm1608, %v1610, %v1606
        %v1612 = vmul.f32 1.0, %v1611
        %v1613 = vrcp.pop %v1287
        %v1614 = vmul.f32 %v1287, %v1613
        %v1615 = vsub.f32 1.0, %v1614
        %v1616 = vmul.f32 %v1613, %v1615
        %v1617 = vadd.f32 %v1613, %v1616
        %vm1618 = vweird.f32 %v1287
        %vm1619 = vweird.f32 %v1613
        %vm1620 = vmor %vm1618, %vm1619
        %v1621 = vsel %vm1620, %v1613, %v1617
        %v1622 = vand.u32 2147483647, %v1287
        %vm1623 = vcmp.eq.f32.partialorder %v1622, 8.507059e+37
        %v1624 = vand.u32 %v1287, 2147483648
        %v1625 = vor.u32 1.1754944e-38, %v1624
        %v1626 = vsel %vm1623, %v1625, %v1621
        %v1627 = vmul.f32 1.0, %v1626
        %v1628 = vrcp.pop %v1288
        %v1629 = vmul.f32 %v1288, %v1628
        %v1630 = vsub.f32 1.0, %v1629
        %v1631 = vmul.f32 %v1628, %v1630
        %v1632 = vadd.f32 %v1628, %v1631
        %vm1633 = vweird.f32 %v1288
        %vm1634 = vweird.f32 %v1628
        %vm1635 = vmor %vm1633, %vm1634
        %v1636 = vsel %vm1635, %v1628, %v1632
        %v1637 = vand.u32 2147483647, %v1288
        %vm1638 = vcmp.eq.f32.partialorder %v1637, 8.507059e+37
        %v1639 = vand.u32 %v1288, 2147483648
        %v1640 = vor.u32 1.1754944e-38, %v1639
        %v1641 = vsel %vm1638, %v1640, %v1636
        %v1642 = vmul.f32 1.0, %v1641
        %v1643 = vrcp.pop %v1289
        %v1644 = vmul.f32 %v1289, %v1643
        %v1645 = vsub.f32 1.0, %v1644
        %v1646 = vmul.f32 %v1643, %v1645
        %v1647 = vadd.f32 %v1643, %v1646
        %vm1648 = vweird.f32 %v1289
        %vm1649 = vweird.f32 %v1643
        %vm1650 = vmor %vm1648, %vm1649
        %v1651 = vsel %vm1650, %v1643, %v1647
        %v1652 = vand.u32 2147483647, %v1289
        %vm1653 = vcmp.eq.f32.partialorder %v1652, 8.507059e+37
        %v1654 = vand.u32 %v1289, 2147483648
        %v1655 = vor.u32 1.1754944e-38, %v1654
        %v1656 = vsel %vm1653, %v1655, %v1651
        %v1657 = vmul.f32 1.0, %v1656
        %v1658 = vrcp.pop %v1290
        %v1659 = vmul.f32 %v1290, %v1658
        %v1660 = vsub.f32 1.0, %v1659
        %v1661 = vmul.f32 %v1658, %v1660
        %v1662 = vadd.f32 %v1658, %v1661
        %vm1663 = vweird.f32 %v1290
        %vm1664 = vweird.f32 %v1658
        %vm1665 = vmor %vm1663, %vm1664
        %v1666 = vsel %vm1665, %v1658, %v1662
        %v1667 = vand.u32 2147483647, %v1290
        %vm1668 = vcmp.eq.f32.partialorder %v1667, 8.507059e+37
        %v1669 = vand.u32 %v1290, 2147483648
        %v1670 = vor.u32 1.1754944e-38, %v1669
        %v1671 = vsel %vm1668, %v1670, %v1666
        %v1672 = vmul.f32 1.0, %v1671
        %v1673 = vrcp.pop %v1291
        %v1674 = vmul.f32 %v1291, %v1673
        %v1675 = vsub.f32 1.0, %v1674
        %v1676 = vmul.f32 %v1673, %v1675
        %v1677 = vadd.f32 %v1673, %v1676
        %vm1678 = vweird.f32 %v1291
        %vm1679 = vweird.f32 %v1673
        %vm1680 = vmor %vm1678, %vm1679
        %v1681 = vsel %vm1680, %v1673, %v1677
        %v1682 = vand.u32 2147483647, %v1291
        %vm1683 = vcmp.eq.f32.partialorder %v1682, 8.507059e+37
        %v1684 = vand.u32 %v1291, 2147483648
        %v1685 = vor.u32 1.1754944e-38, %v1684
        %v1686 = vsel %vm1683, %v1685, %v1681
        %v1687 = vmul.f32 1.0, %v1686
        %v1688 = vrcp.pop %v1292
        %v1689 = vmul.f32 %v1292, %v1688
        %v1690 = vsub.f32 1.0, %v1689
        %v1691 = vmul.f32 %v1688, %v1690
        %v1692 = vadd.f32 %v1688, %v1691
        %vm1693 = vweird.f32 %v1292
        %vm1694 = vweird.f32 %v1688
        %vm1695 = vmor %vm1693, %vm1694
        %v1696 = vsel %vm1695, %v1688, %v1692
        %v1697 = vand.u32 2147483647, %v1292
        %vm1698 = vcmp.eq.f32.partialorder %v1697, 8.507059e+37
        %v1699 = vand.u32 %v1292, 2147483648
        %v1700 = vor.u32 1.1754944e-38, %v1699
        %v1701 = vsel %vm1698, %v1700, %v1696
        %v1702 = vmul.f32 1.0, %v1701
        %v1703 = vrcp.pop %v1293
        %v1704 = vmul.f32 %v1293, %v1703
        %v1705 = vsub.f32 1.0, %v1704
        %v1706 = vmul.f32 %v1703, %v1705
        %v1707 = vadd.f32 %v1703, %v1706
        %vm1708 = vweird.f32 %v1293
        %vm1709 = vweird.f32 %v1703
        %vm1710 = vmor %vm1708, %vm1709
        %v1711 = vsel %vm1710, %v1703, %v1707
        %v1712 = vand.u32 2147483647, %v1293
        %vm1713 = vcmp.eq.f32.partialorder %v1712, 8.507059e+37
        %v1714 = vand.u32 %v1293, 2147483648
        %v1715 = vor.u32 1.1754944e-38, %v1714
        %v1716 = vsel %vm1713, %v1715, %v1711
        %v1717 = vmul.f32 1.0, %v1716
        %v1718 = vrcp.pop %v1294
        %v1719 = vmul.f32 %v1294, %v1718
        %v1720 = vsub.f32 1.0, %v1719
        %v1721 = vmul.f32 %v1718, %v1720
        %v1722 = vadd.f32 %v1718, %v1721
        %vm1723 = vweird.f32 %v1294
        %vm1724 = vweird.f32 %v1718
        %vm1725 = vmor %vm1723, %vm1724
        %v1726 = vsel %vm1725, %v1718, %v1722
        %v1727 = vand.u32 2147483647, %v1294
        %vm1728 = vcmp.eq.f32.partialorder %v1727, 8.507059e+37
        %v1729 = vand.u32 %v1294, 2147483648
        %v1730 = vor.u32 1.1754944e-38, %v1729
        %v1731 = vsel %vm1728, %v1730, %v1726
        %v1732 = vmul.f32 1.0, %v1731
        %v1733 = vrcp.pop %v1295
        %v1734 = vmul.f32 %v1295, %v1733
        %v1735 = vsub.f32 1.0, %v1734
        %v1736 = vmul.f32 %v1733, %v1735
        %v1737 = vadd.f32 %v1733, %v1736
        %vm1738 = vweird.f32 %v1295
        %vm1739 = vweird.f32 %v1733
        %vm1740 = vmor %vm1738, %vm1739
        %v1741 = vsel %vm1740, %v1733, %v1737
        %v1742 = vand.u32 2147483647, %v1295
        %vm1743 = vcmp.eq.f32.partialorder %v1742, 8.507059e+37
        %v1744 = vand.u32 %v1295, 2147483648
        %v1745 = vor.u32 1.1754944e-38, %v1744
        %v1746 = vsel %vm1743, %v1745, %v1741
        %v1747 = vmul.f32 1.0, %v1746
        %v1748 = vrcp.pop %v1296
        %v1749 = vmul.f32 %v1296, %v1748
        %v1750 = vsub.f32 1.0, %v1749
        %v1751 = vmul.f32 %v1748, %v1750
        %v1752 = vadd.f32 %v1748, %v1751
        %vm1753 = vweird.f32 %v1296
        %vm1754 = vweird.f32 %v1748
        %vm1755 = vmor %vm1753, %vm1754
        %v1756 = vsel %vm1755, %v1748, %v1752
        %v1757 = vand.u32 2147483647, %v1296
        %vm1758 = vcmp.eq.f32.partialorder %v1757, 8.507059e+37
        %v1759 = vand.u32 %v1296, 2147483648
        %v1760 = vor.u32 1.1754944e-38, %v1759
        %v1761 = vsel %vm1758, %v1760, %v1756
        %v1762 = vmul.f32 1.0, %v1761
        %v1763 = vrcp.pop %v1297
        %v1764 = vmul.f32 %v1297, %v1763
        %v1765 = vsub.f32 1.0, %v1764
        %v1766 = vmul.f32 %v1763, %v1765
        %v1767 = vadd.f32 %v1763, %v1766
        %vm1768 = vweird.f32 %v1297
        %vm1769 = vweird.f32 %v1763
        %vm1770 = vmor %vm1768, %vm1769
        %v1771 = vsel %vm1770, %v1763, %v1767
        %v1772 = vand.u32 2147483647, %v1297
        %vm1773 = vcmp.eq.f32.partialorder %v1772, 8.507059e+37
        %v1774 = vand.u32 %v1297, 2147483648
        %v1775 = vor.u32 1.1754944e-38, %v1774
        %v1776 = vsel %vm1773, %v1775, %v1771
        %v1777 = vmul.f32 1.0, %v1776
        %v1778 = vmul.f32 %v326, %v1312
        %v1779 = vmul.f32 %v327, %v1327
        %v1780 = vmul.f32 %v328, %v1342
        %v1781 = vmul.f32 %v329, %v1357
        %v1782 = vmul.f32 %v330, %v1372
        %v1783 = vmul.f32 %v331, %v1387
        %v1784 = vmul.f32 %v332, %v1402
        %v1785 = vmul.f32 %v333, %v1417
        %v1786 = vmul.f32 %v334, %v1432
        %v1787 = vmul.f32 %v335, %v1447
        %v1788 = vmul.f32 %v336, %v1462
        %v1789 = vmul.f32 %v337, %v1477
        %v1790 = vmul.f32 %v338, %v1492
        %v1791 = vmul.f32 %v339, %v1507
        %v1792 = vmul.f32 %v340, %v1522
        %v1793 = vmul.f32 %v341, %v1537
        %v1794 = vmul.f32 %v342, %v1552
        %v1795 = vmul.f32 %v343, %v1567
        %v1796 = vmul.f32 %v344, %v1582
        %v1797 = vmul.f32 %v345, %v1597
        %v1798 = vmul.f32 %v346, %v1612
        %v1799 = vmul.f32 %v347, %v1627
        %v1800 = vmul.f32 %v348, %v1642
        %v1801 = vmul.f32 %v349, %v1657
        %v1802 = vmul.f32 %v350, %v1672
        %v1803 = vmul.f32 %v351, %v1687
        %v1804 = vmul.f32 %v352, %v1702
        %v1805 = vmul.f32 %v353, %v1717
        %v1806 = vmul.f32 %v354, %v1732
        %v1807 = vmul.f32 %v355, %v1747
        %v1808 = vmul.f32 %v356, %v1762
        %v1809 = vmul.f32 %v357, %v1777
        %1810 = vst [vmem:[%s316] sm:$0xff] %v1778
        %1811 = vst [vmem:[%s316 + $0x8] sm:$0xff] %v1779
        %1812 = vst [vmem:[%s316 + $0x10] sm:$0xff] %v1780
        %1813 = vst [vmem:[%s316 + $0x18] sm:$0xff] %v1781
        %1814 = vst [vmem:[%s316 + $0x20] sm:$0xff] %v1782
        %1815 = vst [vmem:[%s316 + $0x28] sm:$0xff] %v1783
        %1816 = vst [vmem:[%s316 + $0x30] sm:$0xff] %v1784
        %1817 = vst [vmem:[%s316 + $0x38] sm:$0xff] %v1785
        %1818 = vst [vmem:[%s316 + $0x40] sm:$0xff] %v1786
        %1819 = vst [vmem:[%s316 + $0x48] sm:$0xff] %v1787
        %1820 = vst [vmem:[%s316 + $0x50] sm:$0xff] %v1788
        %1821 = vst [vmem:[%s316 + $0x58] sm:$0xff] %v1789
        %1822 = vst [vmem:[%s316 + $0x60] sm:$0xff] %v1790
        %1823 = vst [vmem:[%s316 + $0x68] sm:$0xff] %v1791
        %1824 = vst [vmem:[%s316 + $0x70] sm:$0xff] %v1792
        %1825 = vst [vmem:[%s316 + $0x78] sm:$0xff] %v1793
        %1826 = vst [vmem:[%s316 + $0x80] sm:$0xff] %v1794
        %1827 = vst [vmem:[%s316 + $0x88] sm:$0xff] %v1795
        %1828 = vst [vmem:[%s316 + $0x90] sm:$0xff] %v1796
        %1829 = vst [vmem:[%s316 + $0x98] sm:$0xff] %v1797
        %1830 = vst [vmem:[%s316 + $0xa0] sm:$0xff] %v1798
        %1831 = vst [vmem:[%s316 + $0xa8] sm:$0xff] %v1799
        %1832 = vst [vmem:[%s316 + $0xb0] sm:$0xff] %v1800
        %1833 = vst [vmem:[%s316 + $0xb8] sm:$0xff] %v1801
        %1834 = vst [vmem:[%s316 + $0xc0] sm:$0xff] %v1802
        %1835 = vst [vmem:[%s316 + $0xc8] sm:$0xff] %v1803
        %1836 = vst [vmem:[%s316 + $0xd0] sm:$0xff] %v1804
        %1837 = vst [vmem:[%s316 + $0xd8] sm:$0xff] %v1805
        %1838 = vst [vmem:[%s316 + $0xe0] sm:$0xff] %v1806
        %1839 = vst [vmem:[%s316 + $0xe8] sm:$0xff] %v1807
        %1840 = vst [vmem:[%s316 + $0xf0] sm:$0xff] %v1808
        %1841 = vst [vmem:[%s316 + $0xf8] sm:$0xff] %v1809
        %s1842 = sand.u32 %s189, 1
        %s1843 = scalar_lea.sflag [#allocation4], %s1842
        %s1844 = sand.u32 %s189, 1
        %s1845 = smul.addr %s1844, 256
        %s1846 = scalar_lea.vmem [#allocation5], %s1845
        // Predicated region
        $region53: #{attention_gate.1} parent=47 // pred_check
          %p1847 = pneg %p199
        $region54: #{attention_gate.1} parent=47 // pred_check_branch
          %1849 = sbr.rel (%p1847) target = $region56
        $region55: #{attention_gate.1} parent=47 // pred_region
          %s1850 = smul.u32 32, %s24
          %1852 = vsyncadd %s1843, 0
          %s1853 = smul.addr %s1850, 8
          %s1854 = scalar_lea.hbm %s7, %s1853
          %s1855 = sshll.u32 %s1846, 4
          %s1856 = int_to_ptr.vmem [resolvable:$true] %s1855
          %s1857 = sshll.u32 %s1854, 4
          %s1858 = int_to_ptr.hbm [resolvable:$true] %s1857
          %1863 = dma.vmem_to_hbm [thread:$0]  %s1856, 4096, %s1858, %s1843, 128, 128, 8
        $region56: #{attention_gate.1} parent=47 // pred_fallthru
          _
      $region48: #{attention_gate.1} parent=5 // pred_fallthru
        _
      %p1864 = scmp.le.s32.totalorder 2, %s19
      // Predicated region
      $region57: #{attention_gate.1} parent=5 // pred_check
        %p1865 = pneg %p1864
      $region58: #{attention_gate.1} parent=5 // pred_check_branch
        %1867 = sbr.rel (%p1865) target = $region60
      $region59: #{attention_gate.1} parent=5 // pred_region
        %s1868 = ssub.s32 %s19, 2
        // Predicated region
        $region61: #{attention_gate.1} parent=59 // pred_check
          %p1869 = pneg %p205
        $region62: #{attention_gate.1} parent=59 // pred_check_branch
          %1871 = sbr.rel (%p1869) target = $region64
        $region63: #{attention_gate.1} parent=59 // pred_region
          %s1872 = sand.u32 %s190, 1
          %s1873 = scalar_lea.sflag [#allocation4], %s1872
          %s1874 = sand.u32 %s190, 1
          %s1875 = smul.addr %s1874, 256
          %s1876 = scalar_lea.vmem [#allocation5], %s1875
          %1878 = dma.done %s1873, 4096
        $region64: #{attention_gate.1} parent=59 // pred_fallthru
          _
      $region60: #{attention_gate.1} parent=5 // pred_fallthru
        _
    $region6: #{attention_gate.1} parent=1 // loop_footer
      %s23 = sadd.s32 1, %s19
    $region7: #{attention_gate.1} parent=1 // loop_footer_branch
      %18 = sbr.rel target = $region3
    $region8: #{attention_gate.1} parent=1 // loop_exit
      _
    %1879 = vsyncpa [#allocation3], 1
    %s1880 = scalar_lea.sflag [#allocation3], 1
    %1881 = vsyncpa %s1880, 1
    %1882 = vsyncpa [#allocation4], 1
    %s1883 = scalar_lea.sflag [#allocation4], 1
    %1884 = vsyncpa %s1883, 1

</llo_original>
